<compile_context>
chip_gen: v7x
topology: tpu7x:2x2x1
jax: 0.10.0
libtpu: 0.0.40
codegen_flags: <defaults>
</compile_context>

<pallas_src>
import functools
import math

import jax
import jax.numpy as jnp
from jax import lax
from jax.experimental import pallas as pl
from jax.experimental.pallas import tpu as pltpu

WINDOW = 4          # local-attention window half-width
HALO = 8            # halo rows fetched on each side (aligned, >= WINDOW)
LN_EPS = 1e-5       # torch.nn.LayerNorm default eps
LANE = 128

assert HALO >= WINDOW and HALO % 8 == 0


def _gelu_exact(t):
    # torch.nn.GELU() default = exact erf formulation
    return 0.5 * t * (1.0 + lax.erf(t * (1.0 / math.sqrt(2.0))))


def potential_kernel(x_ref, halo_ref,
                     w_qr_ref, b_qr_ref, w_kv_ref, b_kv_ref,
                     w_o_ref, b_o_ref, g_ref, beta_ref,
                     o_ref,
                     *, seq_len, d_real, tq, scale):
    i = pl.program_id(1)
    start_q = i * tq
    f32 = jnp.float32
    dp = x_ref.shape[-1]                      # padded hidden (lane multiple)

    x = x_ref[0, :, :]                        # (TQ, Dp)  query tile
    halo = halo_ref[0, 0, :, :]               # (2*HALO, Dp) rows just outside the tile

    # ---- fused [Q | random] projection on the q-tile ------------------------
    qr = jnp.dot(x, w_qr_ref[...], preferred_element_type=f32) + b_qr_ref[...]
    q = qr[:, :dp]
    sence = qr[:, dp:]

    # ---- fused [K | V] projection: resident tile rows + 16 halo rows --------
    kv_m = jnp.dot(x, w_kv_ref[...], preferred_element_type=f32) + b_kv_ref[...]
    kv_h = jnp.dot(halo, w_kv_ref[...], preferred_element_type=f32) + b_kv_ref[...]
    k_m, v_m = kv_m[:, :dp], kv_m[:, dp:]
    k_h, v_h = kv_h[:, :dp], kv_h[:, dp:]

    # ---- banded local attention (scale applied post-matmul in f32) ----------
    s_m = lax.dot_general(q, k_m, (((1,), (1,)), ((), ())),
                          preferred_element_type=f32) * scale        # (TQ, TQ)
    s_h = lax.dot_general(q, k_h, (((1,), (1,)), ((), ())),
                          preferred_element_type=f32) * scale        # (TQ, 16)

    neg = jnp.float32(-1e30)
    q_pos_m = start_q + lax.broadcasted_iota(jnp.int32, (tq, tq), 0)
    k_pos_m = start_q + lax.broadcasted_iota(jnp.int32, (tq, tq), 1)
    s_m = jnp.where(jnp.abs(q_pos_m - k_pos_m) <= WINDOW, s_m, neg)

    q_pos_h = start_q + lax.broadcasted_iota(jnp.int32, (tq, 2 * HALO), 0)
    r = lax.broadcasted_iota(jnp.int32, (tq, 2 * HALO), 1)
    k_pos_h = jnp.where(r < HALO, start_q - HALO + r, start_q + tq - HALO + r)
    valid_h = ((jnp.abs(q_pos_h - k_pos_h) <= WINDOW)
               & (k_pos_h >= 0) & (k_pos_h < seq_len))
    s_h = jnp.where(valid_h, s_h, neg)

    m = jnp.maximum(jnp.max(s_m, axis=-1, keepdims=True),
                    jnp.max(s_h, axis=-1, keepdims=True))
    p_m = jnp.exp(s_m - m)
    p_h = jnp.exp(s_h - m)
    denom = (jnp.sum(p_m, axis=-1, keepdims=True)
             + jnp.sum(p_h, axis=-1, keepdims=True))
    a_m = p_m / denom
    a_h = p_h / denom

    ctx = (jnp.dot(a_m, v_m, preferred_element_type=f32)
           + jnp.dot(a_h, v_h, preferred_element_type=f32))          # (TQ, Dp)
    read = jnp.dot(ctx, w_o_ref[...], preferred_element_type=f32) + b_o_ref[...]

    # ---- shared LayerNorm over the d_real real columns, add, exact GELU ----
    gamma = g_ref[...].astype(f32)
    beta = beta_ref[...].astype(f32)
    col_mask = (lax.broadcasted_iota(jnp.int32, (1, dp), 1) < d_real).astype(f32)
    inv_d = jnp.float32(1.0 / d_real)

    def layernorm(t):
        mu = jnp.sum(t, axis=-1, keepdims=True) * inv_d     # pad cols are 0
        diff = (t - mu) * col_mask
        var = jnp.sum(diff * diff, axis=-1, keepdims=True) * inv_d
        return diff * lax.rsqrt(var + LN_EPS) * gamma + beta

    combine = layernorm(read) + layernorm(sence)
    o_ref[0, :, :] = _gelu_exact(combine).astype(o_ref.dtype)


def _pad2(a, rows, cols):
    r, c = a.shape
    return jnp.pad(a, ((0, rows - r), (0, cols - c)))


def prepare_params(params, size):
    """One-time parameter packing: lane-pad to a 128 multiple and fuse
    [Wq|Wr] / [Wk|Wv].  Padded weight/bias/gamma/beta entries are ZERO so all
    padded hidden columns stay exactly 0 through the whole layer."""
    dp = ((size + LANE - 1) // LANE) * LANE
    return {
        "w_qr": jnp.concatenate([_pad2(params["wq"], dp, dp),
                                 _pad2(params["wr"], dp, dp)], axis=1),
        "b_qr": jnp.concatenate([_pad2(params["bq"], 1, dp),
                                 _pad2(params["br"], 1, dp)], axis=1),
        "w_kv": jnp.concatenate([_pad2(params["wk"], dp, dp),
                                 _pad2(params["wv"], dp, dp)], axis=1),
        "b_kv": jnp.concatenate([_pad2(params["bk"], 1, dp),
                                 _pad2(params["bv"], 1, dp)], axis=1),
        "w_o": _pad2(params["wo"], dp, dp),
        "b_o": _pad2(params["bo"], 1, dp),
        "ln_g": _pad2(params["ln_g"], 1, dp),
        "ln_b": _pad2(params["ln_b"], 1, dp),
    }


def _choose_tq(seq_len):
    """Chip-aware q-tile: larger tiles amortize per-step overhead on
    v5e/v6e (128 MiB VMEM); cap at 256 otherwise (v7x: 64 MiB, 2 TCs)."""
    cap = 256
    try:
        info = pltpu.get_tpu_info()
        if getattr(info, "vmem_capacity_bytes", 0) >= 100 * 1024 * 1024:
            cap = 512
    except Exception:
        pass
    for cand in (512, 256, 128, 64, 32, 16, 8):
        if cand <= cap and seq_len % cand == 0:
            return cand
    return seq_len


def potential_forward(x, packed):
    B, S, D = x.shape
    assert S >= 8, "sequence length must be >= 8"
    dp = packed["w_o"].shape[0]
    tq = _choose_tq(S)
    assert tq >= HALO
    nq = S // tq
    dt = x.dtype

    # Lane-pad the hidden dim (sliced off after the call).
    x_p = jnp.pad(x, ((0, 0), (0, 0), (0, dp - D))) if dp != D else x

    # Halo rows for every q-tile: HALO rows before and after the tile (edge
    # tiles get zero rows; the in-kernel validity mask discards them).  Only
    # these 2*HALO rows are re-read per tile - the tile itself comes from the
    # auto-pipelined x block, so x is no longer fetched twice from HBM.
    zeros = jnp.zeros((B, HALO, dp), dt)
    down = jnp.concatenate([zeros, x_p[:, :S - HALO, :]], axis=1)   # row j = x[j-HALO]
    up = jnp.concatenate([x_p[:, HALO:, :], zeros], axis=1)         # row j = x[j+HALO]
    halo_lo = down.reshape(B, nq, tq, dp)[:, :, :HALO, :]
    halo_hi = up.reshape(B, nq, tq, dp)[:, :, tq - HALO:, :]
    halo = jnp.concatenate([halo_lo, halo_hi], axis=2)              # (B, nq, 16, Dp)

    kernel = functools.partial(potential_kernel, seq_len=S, d_real=D,
                               tq=tq, scale=1.0 / math.sqrt(D))

    def const_spec(shape):
        return pl.BlockSpec(shape, lambda b, i: (0,) * len(shape))

    out_p = pl.pallas_call(
        kernel,
        out_shape=jax.ShapeDtypeStruct((B, S, dp), dt),
        grid=(B, nq),
        in_specs=[
            pl.BlockSpec((1, tq, dp), lambda b, i: (b, i, 0)),           # q-tile
            pl.BlockSpec((1, 1, 2 * HALO, dp), lambda b, i: (b, i, 0, 0)),  # halo
            const_spec((dp, 2 * dp)), const_spec((1, 2 * dp)),           # [Wq|Wr]
            const_spec((dp, 2 * dp)), const_spec((1, 2 * dp)),           # [Wk|Wv]
            const_spec((dp, dp)), const_spec((1, dp)),                   # Wo, bo
            const_spec((1, dp)), const_spec((1, dp)),                    # LN g, b
        ],
        out_specs=pl.BlockSpec((1, tq, dp), lambda b, i: (b, i, 0)),
        compiler_params=pltpu.CompilerParams(
            dimension_semantics=("parallel", "parallel")),
    )(x_p, halo, packed["w_qr"], packed["b_qr"], packed["w_kv"],
      packed["b_kv"], packed["w_o"], packed["b_o"],
      packed["ln_g"], packed["ln_b"])
    return out_p[..., :D]


def potential_reference(x, params):
    """Pure-JAX reference (dense masked attention)."""
    B, S, D = x.shape
    q = x @ params["wq"] + params["bq"]
    k = x @ params["wk"] + params["bk"]
    v = x @ params["wv"] + params["bv"]
    scores = jnp.einsum("bsd,btd->bst", q, k) / math.sqrt(D)
    idx = jnp.arange(S)
    mask = jnp.abs(idx[:, None] - idx[None, :]) <= WINDOW
    scores = jnp.where(mask[None], scores, -1e30)
    attn = jax.nn.softmax(scores, axis=-1)
    read = jnp.einsum("bst,btd->bsd", attn, v) @ params["wo"] + params["bo"]
    sence = x @ params["wr"] + params["br"]

    def ln(t):
        mu = jnp.mean(t, axis=-1, keepdims=True)
        var = jnp.mean((t - mu) ** 2, axis=-1, keepdims=True)
        return (t - mu) / jnp.sqrt(var + LN_EPS) * params["ln_g"] + params["ln_b"]

    combine = ln(read) + ln(sence)
    return jax.nn.gelu(combine, approximate=False)


def init_params(key, size):
    keys = jax.random.split(key, 10)
    scale = 1.0 / math.sqrt(size)

    def lin(kw, kb):
        w = jax.random.uniform(kw, (size, size), jnp.float32, -scale, scale)
        b = jax.random.uniform(kb, (1, size), jnp.float32, -scale, scale)
        return w, b

    wq, bq = lin(keys[0], keys[1])
    wk, bk = lin(keys[2], keys[3])
    wv, bv = lin(keys[4], keys[5])
    wo, bo = lin(keys[6], keys[7])
    wr, br = lin(keys[8], keys[9])
    return {
        "wq": wq, "bq": bq, "wk": wk, "bk": bk, "wv": wv, "bv": bv,
        "wo": wo, "bo": bo, "wr": wr, "br": br,
        "ln_g": jnp.ones((1, size), jnp.float32),
        "ln_b": jnp.zeros((1, size), jnp.float32),
    }


if __name__ == "__main__":
    fwd = jax.jit(potential_forward)

    # Small config implied by the module: batch=2, seq=8, hidden=32.
    key = jax.random.PRNGKey(0)
    kx, kp = jax.random.split(key)
    B, S, D = 2, 8, 32
    x = jax.random.normal(kx, (B, S, D), jnp.float32)
    params = init_params(kp, D)
    packed = prepare_params(params, D)      # one-time weight fusion + padding

    out = jax.block_until_ready(fwd(x, packed))
    ref = potential_reference(x, params)
    assert out.shape == (B, S, D)
    assert jnp.allclose(out, ref, atol=2e-3, rtol=2e-3), "mismatch (small)"

    # Second config exercising the multi-tile banded path (halo tiles, edge
    # clamping at both ends of the sequence).
    kx2, kp2 = jax.random.split(jax.random.PRNGKey(1))
    B2, S2, D2 = 1, 512, 32
    x2 = jax.random.normal(kx2, (B2, S2, D2), jnp.float32)
    params2 = init_params(kp2, D2)
    packed2 = prepare_params(params2, D2)
    out2 = jax.block_until_ready(fwd(x2, packed2))
    ref2 = potential_reference(x2, params2)
    assert jnp.allclose(out2, ref2, atol=2e-3, rtol=2e-3), "mismatch (tiled)"

    print("KERNEL_OK")
</pallas_src>

<mosaic_0001>
module attributes {stable_mosaic.version = 11 : i64} {
  func.func @potential_kernel(%arg0: i32, %arg1: i32, %arg2: memref<1x8x128xf32, #tpu.memory_space<vmem>>, %arg3: memref<1x1x16x128xf32, #tpu.memory_space<vmem>>, %arg4: memref<128x256xf32, #tpu.memory_space<vmem>>, %arg5: memref<1x256xf32, #tpu.memory_space<vmem>>, %arg6: memref<128x256xf32, #tpu.memory_space<vmem>>, %arg7: memref<1x256xf32, #tpu.memory_space<vmem>>, %arg8: memref<128x128xf32, #tpu.memory_space<vmem>>, %arg9: memref<1x128xf32, #tpu.memory_space<vmem>>, %arg10: memref<1x128xf32, #tpu.memory_space<vmem>>, %arg11: memref<1x128xf32, #tpu.memory_space<vmem>>, %arg12: memref<1x8x128xf32, #tpu.memory_space<vmem>>) attributes {dimension_semantics = [#tpu.dimension_semantics<parallel>, #tpu.dimension_semantics<parallel>], iteration_bounds = array<i64: 2, 1>, scalar_prefetch = 0 : i64, scratch_operands = 0 : i64, tpu.core_type = #tpu.core_type<tc>, window_params = [{transform_indices = @transform_0, window_bounds = array<i64: 1, 8, 128>}, {transform_indices = @transform_1, window_bounds = array<i64: 1, 1, 16, 128>}, {pipeline_mode = #tpu.pipeline_mode<synchronous>, transform_indices = @transform_2, window_bounds = array<i64: 128, 256>}, {pipeline_mode = #tpu.pipeline_mode<synchronous>, transform_indices = @transform_3, window_bounds = array<i64: 1, 256>}, {pipeline_mode = #tpu.pipeline_mode<synchronous>, transform_indices = @transform_4, window_bounds = array<i64: 128, 256>}, {pipeline_mode = #tpu.pipeline_mode<synchronous>, transform_indices = @transform_5, window_bounds = array<i64: 1, 256>}, {pipeline_mode = #tpu.pipeline_mode<synchronous>, transform_indices = @transform_6, window_bounds = array<i64: 128, 128>}, {pipeline_mode = #tpu.pipeline_mode<synchronous>, transform_indices = @transform_7, window_bounds = array<i64: 1, 128>}, {pipeline_mode = #tpu.pipeline_mode<synchronous>, transform_indices = @transform_8, window_bounds = array<i64: 1, 128>}, {pipeline_mode = #tpu.pipeline_mode<synchronous>, transform_indices = @transform_9, window_bounds = array<i64: 1, 128>}, {transform_indices = @transform_10, window_bounds = array<i64: 1, 8, 128>}]} {
    %c8_i32 = arith.constant 8 : i32
    %0 = arith.muli %arg1, %c8_i32 : i32
    %c0 = arith.constant 0 : index
    %c0_0 = arith.constant 0 : index
    %c0_1 = arith.constant 0 : index
    %1 = vector.load %arg2[%c0, %c0_0, %c0_1] : memref<1x8x128xf32, #tpu.memory_space<vmem>>, vector<1x8x128xf32>
    %2 = vector.shape_cast %1 : vector<1x8x128xf32> to vector<8x128xf32>
    %c0_2 = arith.constant 0 : index
    %c0_3 = arith.constant 0 : index
    %c0_4 = arith.constant 0 : index
    %c0_5 = arith.constant 0 : index
    %3 = vector.load %arg3[%c0_2, %c0_3, %c0_4, %c0_5] : memref<1x1x16x128xf32, #tpu.memory_space<vmem>>, vector<1x1x16x128xf32>
    %4 = vector.shape_cast %3 : vector<1x1x16x128xf32> to vector<16x128xf32>
    %c0_6 = arith.constant 0 : index
    %c0_7 = arith.constant 0 : index
    %5 = vector.load %arg4[%c0_6, %c0_7] : memref<128x256xf32, #tpu.memory_space<vmem>>, vector<128x256xf32>
    %cst = arith.constant dense<0.000000e+00> : vector<8x256xf32>
    %6 = tpu.matmul %2, %5, %cst {dimension_numbers = #tpu.dot_dimension_numbers<[1], [0], [0], [1], [0, 0, 1, 1], [], []>} : vector<8x128xf32>, vector<128x256xf32>, vector<8x256xf32> -> vector<8x256xf32>
    %c0_8 = arith.constant 0 : index
    %c0_9 = arith.constant 0 : index
    %7 = vector.load %arg5[%c0_8, %c0_9] : memref<1x256xf32, #tpu.memory_space<vmem>>, vector<1x256xf32>
    %8 = vector.broadcast %7 : vector<1x256xf32> to vector<8x256xf32>
    %9 = arith.addf %6, %8 : vector<8x256xf32>
    %10 = vector.extract_strided_slice %9 {offsets = [0, 0], sizes = [8, 128], strides = [1, 1]} : vector<8x256xf32> to vector<8x128xf32>
    %11 = vector.extract_strided_slice %9 {offsets = [0, 128], sizes = [8, 128], strides = [1, 1]} : vector<8x256xf32> to vector<8x128xf32>
    %c0_10 = arith.constant 0 : index
    %c0_11 = arith.constant 0 : index
    %12 = vector.load %arg6[%c0_10, %c0_11] : memref<128x256xf32, #tpu.memory_space<vmem>>, vector<128x256xf32>
    %cst_12 = arith.constant dense<0.000000e+00> : vector<8x256xf32>
    %13 = tpu.matmul %2, %12, %cst_12 {dimension_numbers = #tpu.dot_dimension_numbers<[1], [0], [0], [1], [0, 0, 1, 1], [], []>} : vector<8x128xf32>, vector<128x256xf32>, vector<8x256xf32> -> vector<8x256xf32>
    %c0_13 = arith.constant 0 : index
    %c0_14 = arith.constant 0 : index
    %14 = vector.load %arg7[%c0_13, %c0_14] : memref<1x256xf32, #tpu.memory_space<vmem>>, vector<1x256xf32>
    %15 = vector.broadcast %14 : vector<1x256xf32> to vector<8x256xf32>
    %16 = arith.addf %13, %15 : vector<8x256xf32>
    %c0_15 = arith.constant 0 : index
    %c0_16 = arith.constant 0 : index
    %17 = vector.load %arg6[%c0_15, %c0_16] : memref<128x256xf32, #tpu.memory_space<vmem>>, vector<128x256xf32>
    %cst_17 = arith.constant dense<0.000000e+00> : vector<16x256xf32>
    %18 = tpu.matmul %4, %17, %cst_17 {dimension_numbers = #tpu.dot_dimension_numbers<[1], [0], [0], [1], [0, 0, 1, 1], [], []>} : vector<16x128xf32>, vector<128x256xf32>, vector<16x256xf32> -> vector<16x256xf32>
    %c0_18 = arith.constant 0 : index
    %c0_19 = arith.constant 0 : index
    %19 = vector.load %arg7[%c0_18, %c0_19] : memref<1x256xf32, #tpu.memory_space<vmem>>, vector<1x256xf32>
    %20 = vector.broadcast %19 : vector<1x256xf32> to vector<16x256xf32>
    %21 = arith.addf %18, %20 : vector<16x256xf32>
    %22 = vector.extract_strided_slice %16 {offsets = [0, 0], sizes = [8, 128], strides = [1, 1]} : vector<8x256xf32> to vector<8x128xf32>
    %23 = vector.extract_strided_slice %16 {offsets = [0, 128], sizes = [8, 128], strides = [1, 1]} : vector<8x256xf32> to vector<8x128xf32>
    %24 = vector.extract_strided_slice %21 {offsets = [0, 0], sizes = [16, 128], strides = [1, 1]} : vector<16x256xf32> to vector<16x128xf32>
    %25 = vector.extract_strided_slice %21 {offsets = [0, 128], sizes = [16, 128], strides = [1, 1]} : vector<16x256xf32> to vector<16x128xf32>
    %cst_20 = arith.constant dense<0.000000e+00> : vector<8x8xf32>
    %26 = tpu.matmul %10, %22, %cst_20 {dimension_numbers = #tpu.dot_dimension_numbers<[1], [1], [0], [0], [0, 0, 1, 0], [], []>} : vector<8x128xf32>, vector<8x128xf32>, vector<8x8xf32> -> vector<8x8xf32>
    %cst_21 = arith.constant 0.176776692 : f32
    %27 = vector.broadcast %cst_21 : f32 to vector<8x8xf32>
    %28 = arith.mulf %26, %27 : vector<8x8xf32>
    %cst_22 = arith.constant dense<0.000000e+00> : vector<8x16xf32>
    %29 = tpu.matmul %10, %24, %cst_22 {dimension_numbers = #tpu.dot_dimension_numbers<[1], [1], [0], [0], [0, 0, 1, 0], [], []>} : vector<8x128xf32>, vector<16x128xf32>, vector<8x16xf32> -> vector<8x16xf32>
    %cst_23 = arith.constant 0.176776692 : f32
    %30 = vector.broadcast %cst_23 : f32 to vector<8x16xf32>
    %31 = arith.mulf %29, %30 : vector<8x16xf32>
    %32 = tpu.iota {dimensions = array<i32: 0>} : vector<8x8xi32>
    %33 = vector.broadcast %0 : i32 to vector<8x8xi32>
    %34 = arith.addi %33, %32 : vector<8x8xi32>
    %35 = tpu.iota {dimensions = array<i32: 1>} : vector<8x8xi32>
    %36 = vector.broadcast %0 : i32 to vector<8x8xi32>
    %37 = arith.addi %36, %35 : vector<8x8xi32>
    %38 = arith.subi %34, %37 : vector<8x8xi32>
    %39 = math.absi %38 : vector<8x8xi32>
    %c4_i32 = arith.constant 4 : i32
    %40 = vector.broadcast %c4_i32 : i32 to vector<8x8xi32>
    %41 = arith.cmpi sle, %39, %40 : vector<8x8xi32>
    %cst_24 = arith.constant -1.000000e+30 : f32
    %42 = vector.broadcast %cst_24 : f32 to vector<8x8xf32>
    %43 = arith.select %41, %28, %42 : vector<8x8xi1>, vector<8x8xf32>
    %44 = tpu.iota {dimensions = array<i32: 0>} : vector<8x16xi32>
    %45 = vector.broadcast %0 : i32 to vector<8x16xi32>
    %46 = arith.addi %45, %44 : vector<8x16xi32>
    %47 = tpu.iota {dimensions = array<i32: 1>} : vector<8x16xi32>
    %c8_i32_25 = arith.constant 8 : i32
    %48 = vector.broadcast %c8_i32_25 : i32 to vector<8x16xi32>
    %49 = arith.cmpi slt, %47, %48 : vector<8x16xi32>
    %c8_i32_26 = arith.constant 8 : i32
    %50 = arith.subi %0, %c8_i32_26 : i32
    %51 = vector.broadcast %50 : i32 to vector<8x16xi32>
    %52 = arith.addi %51, %47 : vector<8x16xi32>
    %c8_i32_27 = arith.constant 8 : i32
    %53 = arith.addi %0, %c8_i32_27 : i32
    %c8_i32_28 = arith.constant 8 : i32
    %54 = arith.subi %53, %c8_i32_28 : i32
    %55 = vector.broadcast %54 : i32 to vector<8x16xi32>
    %56 = arith.addi %55, %47 : vector<8x16xi32>
    %57 = arith.select %49, %52, %56 : vector<8x16xi1>, vector<8x16xi32>
    %58 = arith.subi %46, %57 : vector<8x16xi32>
    %59 = math.absi %58 : vector<8x16xi32>
    %c4_i32_29 = arith.constant 4 : i32
    %60 = vector.broadcast %c4_i32_29 : i32 to vector<8x16xi32>
    %61 = arith.cmpi sle, %59, %60 : vector<8x16xi32>
    %c0_i32 = arith.constant 0 : i32
    %62 = vector.broadcast %c0_i32 : i32 to vector<8x16xi32>
    %63 = arith.cmpi sge, %57, %62 : vector<8x16xi32>
    %64 = arith.andi %61, %63 : vector<8x16xi1>
    %c8_i32_30 = arith.constant 8 : i32
    %65 = vector.broadcast %c8_i32_30 : i32 to vector<8x16xi32>
    %66 = arith.cmpi slt, %57, %65 : vector<8x16xi32>
    %67 = arith.andi %64, %66 : vector<8x16xi1>
    %cst_31 = arith.constant -1.000000e+30 : f32
    %68 = vector.broadcast %cst_31 : f32 to vector<8x16xf32>
    %69 = arith.select %67, %31, %68 : vector<8x16xi1>, vector<8x16xf32>
    %cst_32 = arith.constant dense<0xFF800000> : vector<8xf32>
    %70 = vector.multi_reduction <maximumf>, %43, %cst_32 [1] : vector<8x8xf32> to vector<8xf32>
    %71 = vector.shape_cast %70 : vector<8xf32> to vector<8x1xf32>
    %cst_33 = arith.constant dense<0xFF800000> : vector<8xf32>
    %72 = vector.multi_reduction <maximumf>, %69, %cst_33 [1] : vector<8x16xf32> to vector<8xf32>
    %73 = vector.shape_cast %72 : vector<8xf32> to vector<8x1xf32>
    %74 = arith.maximumf %71, %73 : vector<8x1xf32>
    %75 = vector.broadcast %74 : vector<8x1xf32> to vector<8x8xf32>
    %76 = arith.subf %43, %75 : vector<8x8xf32>
    %77 = math.exp %76 : vector<8x8xf32>
    %78 = vector.broadcast %74 : vector<8x1xf32> to vector<8x16xf32>
    %79 = arith.subf %69, %78 : vector<8x16xf32>
    %80 = math.exp %79 : vector<8x16xf32>
    %cst_34 = arith.constant dense<0.000000e+00> : vector<8xf32>
    %81 = vector.multi_reduction <add>, %77, %cst_34 [1] : vector<8x8xf32> to vector<8xf32>
    %82 = vector.shape_cast %81 : vector<8xf32> to vector<8x1xf32>
    %cst_35 = arith.constant dense<0.000000e+00> : vector<8xf32>
    %83 = vector.multi_reduction <add>, %80, %cst_35 [1] : vector<8x16xf32> to vector<8xf32>
    %84 = vector.shape_cast %83 : vector<8xf32> to vector<8x1xf32>
    %85 = arith.addf %82, %84 : vector<8x1xf32>
    %86 = vector.broadcast %85 : vector<8x1xf32> to vector<8x8xf32>
    %87 = arith.divf %77, %86 : vector<8x8xf32>
    %88 = vector.broadcast %85 : vector<8x1xf32> to vector<8x16xf32>
    %89 = arith.divf %80, %88 : vector<8x16xf32>
    %cst_36 = arith.constant dense<0.000000e+00> : vector<8x128xf32>
    %90 = tpu.matmul %87, %23, %cst_36 {dimension_numbers = #tpu.dot_dimension_numbers<[1], [0], [0], [1], [0, 0, 1, 1], [], []>} : vector<8x8xf32>, vector<8x128xf32>, vector<8x128xf32> -> vector<8x128xf32>
    %cst_37 = arith.constant dense<0.000000e+00> : vector<8x128xf32>
    %91 = tpu.matmul %89, %25, %cst_37 {dimension_numbers = #tpu.dot_dimension_numbers<[1], [0], [0], [1], [0, 0, 1, 1], [], []>} : vector<8x16xf32>, vector<16x128xf32>, vector<8x128xf32> -> vector<8x128xf32>
    %92 = arith.addf %90, %91 : vector<8x128xf32>
    %c0_38 = arith.constant 0 : index
    %c0_39 = arith.constant 0 : index
    %93 = vector.load %arg8[%c0_38, %c0_39] : memref<128x128xf32, #tpu.memory_space<vmem>>, vector<128x128xf32>
    %cst_40 = arith.constant dense<0.000000e+00> : vector<8x128xf32>
    %94 = tpu.matmul %92, %93, %cst_40 {dimension_numbers = #tpu.dot_dimension_numbers<[1], [0], [0], [1], [0, 0, 1, 1], [], []>} : vector<8x128xf32>, vector<128x128xf32>, vector<8x128xf32> -> vector<8x128xf32>
    %c0_41 = arith.constant 0 : index
    %c0_42 = arith.constant 0 : index
    %95 = vector.load %arg9[%c0_41, %c0_42] : memref<1x128xf32, #tpu.memory_space<vmem>>, vector<1x128xf32>
    %96 = vector.broadcast %95 : vector<1x128xf32> to vector<8x128xf32>
    %97 = arith.addf %94, %96 : vector<8x128xf32>
    %c0_43 = arith.constant 0 : index
    %c0_44 = arith.constant 0 : index
    %98 = vector.load %arg10[%c0_43, %c0_44] : memref<1x128xf32, #tpu.memory_space<vmem>>, vector<1x128xf32>
    %c0_45 = arith.constant 0 : index
    %c0_46 = arith.constant 0 : index
    %99 = vector.load %arg11[%c0_45, %c0_46] : memref<1x128xf32, #tpu.memory_space<vmem>>, vector<1x128xf32>
    %100 = tpu.iota {dimensions = array<i32: 1>} : vector<1x128xi32>
    %c32_i32 = arith.constant 32 : i32
    %101 = vector.broadcast %c32_i32 : i32 to vector<1x128xi32>
    %102 = arith.cmpi slt, %100, %101 : vector<1x128xi32>
    %103 = arith.extui %102 : vector<1x128xi1> to vector<1x128xi32>
    %104 = arith.sitofp %103 : vector<1x128xi32> to vector<1x128xf32>
    %cst_47 = arith.constant dense<0.000000e+00> : vector<8xf32>
    %105 = vector.multi_reduction <add>, %97, %cst_47 [1] : vector<8x128xf32> to vector<8xf32>
    %106 = vector.shape_cast %105 : vector<8xf32> to vector<8x1xf32>
    %cst_48 = arith.constant 3.125000e-02 : f32
    %107 = vector.broadcast %cst_48 : f32 to vector<8x1xf32>
    %108 = arith.mulf %106, %107 : vector<8x1xf32>
    %109 = vector.broadcast %108 : vector<8x1xf32> to vector<8x128xf32>
    %110 = arith.subf %97, %109 : vector<8x128xf32>
    %111 = vector.broadcast %104 : vector<1x128xf32> to vector<8x128xf32>
    %112 = arith.mulf %110, %111 : vector<8x128xf32>
    %113 = arith.mulf %112, %112 : vector<8x128xf32>
    %cst_49 = arith.constant dense<0.000000e+00> : vector<8xf32>
    %114 = vector.multi_reduction <add>, %113, %cst_49 [1] : vector<8x128xf32> to vector<8xf32>
    %115 = vector.shape_cast %114 : vector<8xf32> to vector<8x1xf32>
    %cst_50 = arith.constant 3.125000e-02 : f32
    %116 = vector.broadcast %cst_50 : f32 to vector<8x1xf32>
    %117 = arith.mulf %115, %116 : vector<8x1xf32>
    %cst_51 = arith.constant 9.99999974E-6 : f32
    %118 = vector.broadcast %cst_51 : f32 to vector<8x1xf32>
    %119 = arith.addf %117, %118 : vector<8x1xf32>
    %120 = math.rsqrt %119 : vector<8x1xf32>
    %121 = vector.broadcast %120 : vector<8x1xf32> to vector<8x128xf32>
    %122 = arith.mulf %112, %121 : vector<8x128xf32>
    %123 = vector.broadcast %98 : vector<1x128xf32> to vector<8x128xf32>
    %124 = arith.mulf %122, %123 : vector<8x128xf32>
    %125 = vector.broadcast %99 : vector<1x128xf32> to vector<8x128xf32>
    %126 = arith.addf %124, %125 : vector<8x128xf32>
    %cst_52 = arith.constant dense<0.000000e+00> : vector<8xf32>
    %127 = vector.multi_reduction <add>, %11, %cst_52 [1] : vector<8x128xf32> to vector<8xf32>
    %128 = vector.shape_cast %127 : vector<8xf32> to vector<8x1xf32>
    %cst_53 = arith.constant 3.125000e-02 : f32
    %129 = vector.broadcast %cst_53 : f32 to vector<8x1xf32>
    %130 = arith.mulf %128, %129 : vector<8x1xf32>
    %131 = vector.broadcast %130 : vector<8x1xf32> to vector<8x128xf32>
    %132 = arith.subf %11, %131 : vector<8x128xf32>
    %133 = vector.broadcast %104 : vector<1x128xf32> to vector<8x128xf32>
    %134 = arith.mulf %132, %133 : vector<8x128xf32>
    %135 = arith.mulf %134, %134 : vector<8x128xf32>
    %cst_54 = arith.constant dense<0.000000e+00> : vector<8xf32>
    %136 = vector.multi_reduction <add>, %135, %cst_54 [1] : vector<8x128xf32> to vector<8xf32>
    %137 = vector.shape_cast %136 : vector<8xf32> to vector<8x1xf32>
    %cst_55 = arith.constant 3.125000e-02 : f32
    %138 = vector.broadcast %cst_55 : f32 to vector<8x1xf32>
    %139 = arith.mulf %137, %138 : vector<8x1xf32>
    %cst_56 = arith.constant 9.99999974E-6 : f32
    %140 = vector.broadcast %cst_56 : f32 to vector<8x1xf32>
    %141 = arith.addf %139, %140 : vector<8x1xf32>
    %142 = math.rsqrt %141 : vector<8x1xf32>
    %143 = vector.broadcast %142 : vector<8x1xf32> to vector<8x128xf32>
    %144 = arith.mulf %134, %143 : vector<8x128xf32>
    %145 = vector.broadcast %98 : vector<1x128xf32> to vector<8x128xf32>
    %146 = arith.mulf %144, %145 : vector<8x128xf32>
    %147 = vector.broadcast %99 : vector<1x128xf32> to vector<8x128xf32>
    %148 = arith.addf %146, %147 : vector<8x128xf32>
    %149 = arith.addf %126, %148 : vector<8x128xf32>
    %cst_57 = arith.constant 5.000000e-01 : f32
    %150 = vector.broadcast %cst_57 : f32 to vector<8x128xf32>
    %151 = arith.mulf %150, %149 : vector<8x128xf32>
    %cst_58 = arith.constant 0.707106769 : f32
    %152 = vector.broadcast %cst_58 : f32 to vector<8x128xf32>
    %153 = arith.mulf %149, %152 : vector<8x128xf32>
    %154 = math.erf %153 : vector<8x128xf32>
    %cst_59 = arith.constant 1.000000e+00 : f32
    %155 = vector.broadcast %cst_59 : f32 to vector<8x128xf32>
    %156 = arith.addf %155, %154 : vector<8x128xf32>
    %157 = arith.mulf %151, %156 : vector<8x128xf32>
    %c0_60 = arith.constant 0 : index
    %c0_61 = arith.constant 0 : index
    %c0_62 = arith.constant 0 : index
    %158 = vector.load %arg12[%c0_60, %c0_61, %c0_62] : memref<1x8x128xf32, #tpu.memory_space<vmem>>, vector<1x8x128xf32>
    %159 = vector.shape_cast %158 : vector<1x8x128xf32> to vector<8x128xf32>
    %160 = vector.shape_cast %157 : vector<8x128xf32> to vector<1x8x128xf32>
    tpu.vector_store %arg12[%c0_60, %c0_61, %c0_62], %160 {strides = array<i32>} : memref<1x8x128xf32, #tpu.memory_space<vmem>>, vector<1x8x128xf32>,
    return
  }
  func.func @transform_0(%arg0: i32, %arg1: i32) -> (i32, i32, i32) {
    %c0_i32 = arith.constant 0 : i32
    %c0_i32_0 = arith.constant 0 : i32
    return %arg0, %arg1, %c0_i32 : i32, i32, i32
  }
  func.func @transform_1(%arg0: i32, %arg1: i32) -> (i32, i32, i32, i32) {
    %c0_i32 = arith.constant 0 : i32
    %c0_i32_0 = arith.constant 0 : i32
    %c0_i32_1 = arith.constant 0 : i32
    return %arg0, %arg1, %c0_i32, %c0_i32_0 : i32, i32, i32, i32
  }
  func.func @transform_2(%arg0: i32, %arg1: i32) -> (i32, i32) {
    %c0_i32 = arith.constant 0 : i32
    %c0_i32_0 = arith.constant 0 : i32
    %c0_i32_1 = arith.constant 0 : i32
    return %c0_i32, %c0_i32_0 : i32, i32
  }
  func.func @transform_3(%arg0: i32, %arg1: i32) -> (i32, i32) {
    %c0_i32 = arith.constant 0 : i32
    %c0_i32_0 = arith.constant 0 : i32
    %c0_i32_1 = arith.constant 0 : i32
    return %c0_i32, %c0_i32_0 : i32, i32
  }
  func.func @transform_4(%arg0: i32, %arg1: i32) -> (i32, i32) {
    %c0_i32 = arith.constant 0 : i32
    %c0_i32_0 = arith.constant 0 : i32
    %c0_i32_1 = arith.constant 0 : i32
    return %c0_i32, %c0_i32_0 : i32, i32
  }
  func.func @transform_5(%arg0: i32, %arg1: i32) -> (i32, i32) {
    %c0_i32 = arith.constant 0 : i32
    %c0_i32_0 = arith.constant 0 : i32
    %c0_i32_1 = arith.constant 0 : i32
    return %c0_i32, %c0_i32_0 : i32, i32
  }
  func.func @transform_6(%arg0: i32, %arg1: i32) -> (i32, i32) {
    %c0_i32 = arith.constant 0 : i32
    %c0_i32_0 = arith.constant 0 : i32
    %c0_i32_1 = arith.constant 0 : i32
    return %c0_i32, %c0_i32_0 : i32, i32
  }
  func.func @transform_7(%arg0: i32, %arg1: i32) -> (i32, i32) {
    %c0_i32 = arith.constant 0 : i32
    %c0_i32_0 = arith.constant 0 : i32
    %c0_i32_1 = arith.constant 0 : i32
    return %c0_i32, %c0_i32_0 : i32, i32
  }
  func.func @transform_8(%arg0: i32, %arg1: i32) -> (i32, i32) {
    %c0_i32 = arith.constant 0 : i32
    %c0_i32_0 = arith.constant 0 : i32
    %c0_i32_1 = arith.constant 0 : i32
    return %c0_i32, %c0_i32_0 : i32, i32
  }
  func.func @transform_9(%arg0: i32, %arg1: i32) -> (i32, i32) {
    %c0_i32 = arith.constant 0 : i32
    %c0_i32_0 = arith.constant 0 : i32
    %c0_i32_1 = arith.constant 0 : i32
    return %c0_i32, %c0_i32_0 : i32, i32
  }
  func.func @transform_10(%arg0: i32, %arg1: i32) -> (i32, i32, i32) {
    %c0_i32 = arith.constant 0 : i32
    %c0_i32_0 = arith.constant 0 : i32
    return %arg0, %arg1, %c0_i32 : i32, i32, i32
  }
}

</mosaic_0001>

<llo_original>
// kernel: potential_forward.1
$region0: #{potential_forward.1}
  #allocation0 [shape = 'u32[]', space=smem, size = 0x4, offset = 0x4, fixed_abs, tag = 'smem constant byte address 0x4 - core index']
  #allocation1 [shape = 'u32[144,128]{1,0:T(1,128)}', space=vmem, size = 0x12000, scoped, tag = 'internal scratch']
  %s0 = inlined_call_operand.vmem [shape: f32[2,8,128], index: 0, kind: input, shape index: {}]
  %s1 = inlined_call_operand.vmem [shape: f32[2,1,16,128], index: 1, kind: input, shape index: {}]
  %s2 = inlined_call_operand.hbm [shape: f32[128,256], index: 2, kind: input, shape index: {}]
  %s3 = inlined_call_operand.vmem [shape: f32[1,256], index: 3, kind: input, shape index: {}]
  %s4 = inlined_call_operand.hbm [shape: f32[128,256], index: 4, kind: input, shape index: {}]
  %s5 = inlined_call_operand.vmem [shape: f32[1,256], index: 5, kind: input, shape index: {}]
  %s6 = inlined_call_operand.hbm [shape: f32[128,128], index: 6, kind: input, shape index: {}]
  %s7 = inlined_call_operand.vmem [shape: f32[1,128], index: 7, kind: input, shape index: {}]
  %s8 = inlined_call_operand.vmem [shape: f32[1,128], index: 8, kind: input, shape index: {}]
  %s9 = inlined_call_operand.vmem [shape: f32[1,128], index: 9, kind: input, shape index: {}]
  %s10 = inlined_call_operand.hbm [shape: f32[2,8,128], index: 10, kind: output, shape index: {}]
  %s11 = sld [smem:[#allocation0]]
  $region85: #{potential_forward.1} parent=0
    _
  %s13 = ssub.s32 1, %s11
  %s14 = scalar_select 0, %s13, %s11
  $region1: #{potential_forward.1} parent=0
    #allocation2 [shape = 'u8[131072]{0}', space=vmem, size = 0x20000, scoped, tag = 'input window, operand 2, single buffered']
    #allocation3 [shape = 's32[2]{0}', space=sflag, size = 0x8, scoped, tag = 'scoped memory for potential_forward.1']
    #allocation4 [shape = 's32[2]{0}', space=sflag, size = 0x8, scoped, tag = 'scoped memory for potential_forward.1']
    #allocation5 [shape = 'u8[131072]{0}', space=vmem, size = 0x20000, scoped, tag = 'input window, operand 4, single buffered']
    #allocation6 [shape = 's32[1]{0}', space=sflag, size = 0x4, scoped, tag = 'scoped memory for potential_forward.1']
    #allocation7 [shape = 'u8[65536]{0}', space=vmem, size = 0x10000, scoped, tag = 'input window, operand 6, single buffered']
    #allocation8 [shape = 'u8[8192]{0}', space=vmem, size = 0x2000, scoped, tag = 'output window, operand 0']
    %15 = vsyncpa [#allocation3], 0
    %16 = vsyncpa [#allocation6], 0
    %17 = vsyncpa [#allocation4], 0
    %s18 = scalar_lea.sflag [#allocation4], 1
    %19 = vsyncpa %s18, 0
    loop: start=0, step=1, limit=4
    $region2: #{potential_forward.1} parent=1 // loop_pre_header
      _
    $region3: #{potential_forward.1} parent=1 // loop_header
      %s21 = sphi 0, %s25
      %p22 = scmp.ge.s32.totalorder %s21, 4
      %s28 = sphi 0, %s40
      %s29 = sphi 0, %s36
      %s30 = sphi 0, %s28
      %s31 = sphi 0, %s29
      %s32 = sphi 0, %s30
      %s33 = sphi 0, %s31
      %s45 = sphi 0, %s47
      %s48 = sphi 0, %s45
      %s49 = sphi 0, %s48
      %s65 = sphi 0, %s49
      %s73 = sphi 0, %s75
      %s76 = sphi 0, %s73
      %s77 = sphi 0, %s76
      %s93 = sphi 0, %s77
      %s97 = sphi 0, %s97
      %s99 = sphi 0, %s97
      %s100 = sphi 0, %s99
      %s114 = sphi 0, %s100
      %s118 = sphi 0, %s118
      %s120 = sphi 0, %s118
      %s121 = sphi 0, %s120
      %s135 = sphi 0, %s121
      %s139 = sphi 0, %s139
      %s141 = sphi 0, %s139
      %s142 = sphi 0, %s141
      %s156 = sphi 0, %s142
      %s160 = sphi 0, %s160
      %s162 = sphi 0, %s160
      %s163 = sphi 0, %s162
      %s177 = sphi 0, %s163
      %s181 = sphi 0, %s181
      %s183 = sphi 0, %s181
      %s184 = sphi 0, %s183
      %s198 = sphi 0, %s184
      %s202 = sphi 0, %s202
      %s204 = sphi 0, %s202
      %s205 = sphi 0, %s204
      %s219 = sphi 0, %s205
      %s223 = sphi 0, %s223
      %s225 = sphi 0, %s223
      %s226 = sphi 0, %s225
      %s240 = sphi 0, %s226
      %s244 = sphi 0, %s244
      %s246 = sphi 0, %s244
      %s247 = sphi 0, %s246
      %s261 = sphi 0, %s247
      %s269 = sphi 0, %s271
      %s272 = sphi 0, %s269
      %s273 = sphi 0, %s272
      %s289 = sphi 0, %s273
    $region4: #{potential_forward.1} parent=1 // loop_header_branch
      %24 = sbr.rel (%p22) target = $region8
    $region5: #{potential_forward.1} parent=1 // loop_body
      %s26 = ssub.s32 %s21, 1
      %s27 = ssub.s32 %s21, 2
      %s34 = sadd.s32 1, %s29
      %p35 = scmp.ge.s32.totalorder %s34, 1
      %s36 = scalar_select %p35, 0, %s34
      %s37 = sadd.s32 1, %s28
      %s38 = scalar_select %p35, %s37, %s28
      %p39 = scmp.ge.s32.totalorder %s38, 2
      %s40 = scalar_select %p39, 0, %s38
      %s41 = ssub.s32 %s28, %s40
      %s42 = ssub.s32 %s29, %s36
      %s43 = sor.u32 %s41, %s42
      %p44 = scmp.eq.s32.totalorder %s43, 0
      %s46 = sadd.s32 %s45, 1
      %s47 = scalar_select %p44, %s45, %s46
      %p50 = pneg %p44
      %p51 = scmp.eq.s32.totalorder %s21, 1
      %p52 = por %p50, %p51
      %p53 = scmp.ne.s32.totalorder %s45, %s48
      %p54 = scmp.eq.s32.totalorder %s21, 0
      %p55 = por %p53, %p54
      %p56 = scmp.ne.s32.totalorder %s45, %s48
      %p57 = scmp.eq.s32.totalorder %s26, 1
      %p58 = por %p56, %p57
      %p59 = scmp.ne.s32.totalorder %s48, %s49
      %p60 = scmp.eq.s32.totalorder %s26, 0
      %p61 = por %p59, %p60
      %p62 = scmp.ne.s32.totalorder %s48, %s49
      %p63 = scmp.eq.s32.totalorder %s27, 1
      %p64 = por %p62, %p63
      %p66 = scmp.ne.s32.totalorder %s49, %s65
      %p67 = scmp.eq.s32.totalorder %s27, 0
      %p68 = por %p66, %p67
      %s69 = ssub.s32 %s28, %s40
      %s70 = ssub.s32 %s29, %s36
      %s71 = sor.u32 %s69, %s70
      %p72 = scmp.eq.s32.totalorder %s71, 0
      %s74 = sadd.s32 %s73, 1
      %s75 = scalar_select %p72, %s73, %s74
      %p78 = pneg %p72
      %p79 = scmp.eq.s32.totalorder %s21, 1
      %p80 = por %p78, %p79
      %p81 = scmp.ne.s32.totalorder %s73, %s76
      %p82 = scmp.eq.s32.totalorder %s21, 0
      %p83 = por %p81, %p82
      %p84 = scmp.ne.s32.totalorder %s73, %s76
      %p85 = scmp.eq.s32.totalorder %s26, 1
      %p86 = por %p84, %p85
      %p87 = scmp.ne.s32.totalorder %s76, %s77
      %p88 = scmp.eq.s32.totalorder %s26, 0
      %p89 = por %p87, %p88
      %p90 = scmp.ne.s32.totalorder %s76, %s77
      %p91 = scmp.eq.s32.totalorder %s27, 1
      %p92 = por %p90, %p91
      %p94 = scmp.ne.s32.totalorder %s77, %s93
      %p95 = scmp.eq.s32.totalorder %s27, 0
      %p96 = por %p94, %p95
      %s98 = sadd.s32 %s97, 1
      %p101 = scmp.eq.s32.totalorder %s21, 1
      %p102 = scmp.ne.s32.totalorder %s97, %s99
      %p103 = scmp.eq.s32.totalorder %s21, 0
      %p104 = por %p102, %p103
      %p105 = scmp.ne.s32.totalorder %s97, %s99
      %p106 = scmp.eq.s32.totalorder %s26, 1
      %p107 = por %p105, %p106
      %p108 = scmp.ne.s32.totalorder %s99, %s100
      %p109 = scmp.eq.s32.totalorder %s26, 0
      %p110 = por %p108, %p109
      %p111 = scmp.ne.s32.totalorder %s99, %s100
      %p112 = scmp.eq.s32.totalorder %s27, 1
      %p113 = por %p111, %p112
      %p115 = scmp.ne.s32.totalorder %s100, %s114
      %p116 = scmp.eq.s32.totalorder %s27, 0
      %p117 = por %p115, %p116
      %s119 = sadd.s32 %s118, 1
      %p122 = scmp.eq.s32.totalorder %s21, 1
      %p123 = scmp.ne.s32.totalorder %s118, %s120
      %p124 = scmp.eq.s32.totalorder %s21, 0
      %p125 = por %p123, %p124
      %p126 = scmp.ne.s32.totalorder %s118, %s120
      %p127 = scmp.eq.s32.totalorder %s26, 1
      %p128 = por %p126, %p127
      %p129 = scmp.ne.s32.totalorder %s120, %s121
      %p130 = scmp.eq.s32.totalorder %s26, 0
      %p131 = por %p129, %p130
      %p132 = scmp.ne.s32.totalorder %s120, %s121
      %p133 = scmp.eq.s32.totalorder %s27, 1
      %p134 = por %p132, %p133
      %p136 = scmp.ne.s32.totalorder %s121, %s135
      %p137 = scmp.eq.s32.totalorder %s27, 0
      %p138 = por %p136, %p137
      %s140 = sadd.s32 %s139, 1
      %p143 = scmp.eq.s32.totalorder %s21, 1
      %p144 = scmp.ne.s32.totalorder %s139, %s141
      %p145 = scmp.eq.s32.totalorder %s21, 0
      %p146 = por %p144, %p145
      %p147 = scmp.ne.s32.totalorder %s139, %s141
      %p148 = scmp.eq.s32.totalorder %s26, 1
      %p149 = por %p147, %p148
      %p150 = scmp.ne.s32.totalorder %s141, %s142
      %p151 = scmp.eq.s32.totalorder %s26, 0
      %p152 = por %p150, %p151
      %p153 = scmp.ne.s32.totalorder %s141, %s142
      %p154 = scmp.eq.s32.totalorder %s27, 1
      %p155 = por %p153, %p154
      %p157 = scmp.ne.s32.totalorder %s142, %s156
      %p158 = scmp.eq.s32.totalorder %s27, 0
      %p159 = por %p157, %p158
      %s161 = sadd.s32 %s160, 1
      %p164 = scmp.eq.s32.totalorder %s21, 1
      %p165 = scmp.ne.s32.totalorder %s160, %s162
      %p166 = scmp.eq.s32.totalorder %s21, 0
      %p167 = por %p165, %p166
      %p168 = scmp.ne.s32.totalorder %s160, %s162
      %p169 = scmp.eq.s32.totalorder %s26, 1
      %p170 = por %p168, %p169
      %p171 = scmp.ne.s32.totalorder %s162, %s163
      %p172 = scmp.eq.s32.totalorder %s26, 0
      %p173 = por %p171, %p172
      %p174 = scmp.ne.s32.totalorder %s162, %s163
      %p175 = scmp.eq.s32.totalorder %s27, 1
      %p176 = por %p174, %p175
      %p178 = scmp.ne.s32.totalorder %s163, %s177
      %p179 = scmp.eq.s32.totalorder %s27, 0
      %p180 = por %p178, %p179
      %s182 = sadd.s32 %s181, 1
      %p185 = scmp.eq.s32.totalorder %s21, 1
      %p186 = scmp.ne.s32.totalorder %s181, %s183
      %p187 = scmp.eq.s32.totalorder %s21, 0
      %p188 = por %p186, %p187
      %p189 = scmp.ne.s32.totalorder %s181, %s183
      %p190 = scmp.eq.s32.totalorder %s26, 1
      %p191 = por %p189, %p190
      %p192 = scmp.ne.s32.totalorder %s183, %s184
      %p193 = scmp.eq.s32.totalorder %s26, 0
      %p194 = por %p192, %p193
      %p195 = scmp.ne.s32.totalorder %s183, %s184
      %p196 = scmp.eq.s32.totalorder %s27, 1
      %p197 = por %p195, %p196
      %p199 = scmp.ne.s32.totalorder %s184, %s198
      %p200 = scmp.eq.s32.totalorder %s27, 0
      %p201 = por %p199, %p200
      %s203 = sadd.s32 %s202, 1
      %p206 = scmp.eq.s32.totalorder %s21, 1
      %p207 = scmp.ne.s32.totalorder %s202, %s204
      %p208 = scmp.eq.s32.totalorder %s21, 0
      %p209 = por %p207, %p208
      %p210 = scmp.ne.s32.totalorder %s202, %s204
      %p211 = scmp.eq.s32.totalorder %s26, 1
      %p212 = por %p210, %p211
      %p213 = scmp.ne.s32.totalorder %s204, %s205
      %p214 = scmp.eq.s32.totalorder %s26, 0
      %p215 = por %p213, %p214
      %p216 = scmp.ne.s32.totalorder %s204, %s205
      %p217 = scmp.eq.s32.totalorder %s27, 1
      %p218 = por %p216, %p217
      %p220 = scmp.ne.s32.totalorder %s205, %s219
      %p221 = scmp.eq.s32.totalorder %s27, 0
      %p222 = por %p220, %p221
      %s224 = sadd.s32 %s223, 1
      %p227 = scmp.eq.s32.totalorder %s21, 1
      %p228 = scmp.ne.s32.totalorder %s223, %s225
      %p229 = scmp.eq.s32.totalorder %s21, 0
      %p230 = por %p228, %p229
      %p231 = scmp.ne.s32.totalorder %s223, %s225
      %p232 = scmp.eq.s32.totalorder %s26, 1
      %p233 = por %p231, %p232
      %p234 = scmp.ne.s32.totalorder %s225, %s226
      %p235 = scmp.eq.s32.totalorder %s26, 0
      %p236 = por %p234, %p235
      %p237 = scmp.ne.s32.totalorder %s225, %s226
      %p238 = scmp.eq.s32.totalorder %s27, 1
      %p239 = por %p237, %p238
      %p241 = scmp.ne.s32.totalorder %s226, %s240
      %p242 = scmp.eq.s32.totalorder %s27, 0
      %p243 = por %p241, %p242
      %s245 = sadd.s32 %s244, 1
      %p248 = scmp.eq.s32.totalorder %s21, 1
      %p249 = scmp.ne.s32.totalorder %s244, %s246
      %p250 = scmp.eq.s32.totalorder %s21, 0
      %p251 = por %p249, %p250
      %p252 = scmp.ne.s32.totalorder %s244, %s246
      %p253 = scmp.eq.s32.totalorder %s26, 1
      %p254 = por %p252, %p253
      %p255 = scmp.ne.s32.totalorder %s246, %s247
      %p256 = scmp.eq.s32.totalorder %s26, 0
      %p257 = por %p255, %p256
      %p258 = scmp.ne.s32.totalorder %s246, %s247
      %p259 = scmp.eq.s32.totalorder %s27, 1
      %p260 = por %p258, %p259
      %p262 = scmp.ne.s32.totalorder %s247, %s261
      %p263 = scmp.eq.s32.totalorder %s27, 0
      %p264 = por %p262, %p263
      %s265 = ssub.s32 %s28, %s40
      %s266 = ssub.s32 %s29, %s36
      %s267 = sor.u32 %s265, %s266
      %p268 = scmp.eq.s32.totalorder %s267, 0
      %s270 = sadd.s32 %s269, 1
      %s271 = scalar_select %p268, %s269, %s270
      %p274 = pneg %p268
      %p275 = scmp.eq.s32.totalorder %s21, 1
      %p276 = por %p274, %p275
      %p277 = scmp.ne.s32.totalorder %s269, %s272
      %p278 = scmp.eq.s32.totalorder %s21, 0
      %p279 = por %p277, %p278
      %p280 = scmp.ne.s32.totalorder %s269, %s272
      %p281 = scmp.eq.s32.totalorder %s26, 1
      %p282 = por %p280, %p281
      %p283 = scmp.ne.s32.totalorder %s272, %s273
      %p284 = scmp.eq.s32.totalorder %s26, 0
      %p285 = por %p283, %p284
      %p286 = scmp.ne.s32.totalorder %s272, %s273
      %p287 = scmp.eq.s32.totalorder %s27, 1
      %p288 = por %p286, %p287
      %p290 = scmp.ne.s32.totalorder %s273, %s289
      %p291 = scmp.eq.s32.totalorder %s27, 0
      %p292 = por %p290, %p291
      %p293 = scmp.le.s32.totalorder 1, %s21
      %p294 = scmp.lt.s32.totalorder %s21, 3
      %p295 = pnand %p293, %p294
      %p296 = pneg %p295
      // Predicated region
      $region9: #{potential_forward.1} parent=5 // pred_check
        _
      $region10: #{potential_forward.1} parent=5 // pred_check_branch
        %298 = sbr.rel (%p295) target = $region12
      $region11: #{potential_forward.1} parent=5 // pred_region
        %s299 = ssub.s32 %s21, 1
        // Predicated region
        $region13: #{potential_forward.1} parent=11 // pred_check
          %p300 = pneg %p110
        $region14: #{potential_forward.1} parent=11 // pred_check_branch
          %302 = sbr.rel (%p300) target = $region16
        $region15: #{potential_forward.1} parent=11 // pred_region
          %s304 = ssub.s32 4096, 4096
          %305 = vsyncadd [#allocation3], %s304
          %s306 = sshll.u32 [#allocation2], 4
          %s307 = int_to_ptr.vmem [resolvable:$true] %s306
          %312 = dma.hbm_to_vmem [thread:$0]  %s2, 4096, %s307, [#allocation3], 256, 256, 16
        $region16: #{potential_forward.1} parent=11 // pred_fallthru
          _
        // Predicated region
        $region17: #{potential_forward.1} parent=11 // pred_check
          %p313 = pneg %p131
        $region18: #{potential_forward.1} parent=11 // pred_check_branch
          %315 = sbr.rel (%p313) target = $region20
        $region19: #{potential_forward.1} parent=11 // pred_region
          _
        $region20: #{potential_forward.1} parent=11 // pred_fallthru
          _
        // Predicated region
        $region21: #{potential_forward.1} parent=11 // pred_check
          %p316 = pneg %p152
        $region22: #{potential_forward.1} parent=11 // pred_check_branch
          %318 = sbr.rel (%p316) target = $region24
        $region23: #{potential_forward.1} parent=11 // pred_region
          %s320 = ssub.s32 4096, 4096
          %321 = vsyncadd [#allocation6], %s320
          %s322 = sshll.u32 [#allocation5], 4
          %s323 = int_to_ptr.vmem [resolvable:$true] %s322
          %328 = dma.hbm_to_vmem [thread:$0]  %s4, 4096, %s323, [#allocation6], 256, 256, 16
        $region24: #{potential_forward.1} parent=11 // pred_fallthru
          _
        // Predicated region
        $region25: #{potential_forward.1} parent=11 // pred_check
          %p329 = pneg %p173
        $region26: #{potential_forward.1} parent=11 // pred_check_branch
          %331 = sbr.rel (%p329) target = $region28
        $region27: #{potential_forward.1} parent=11 // pred_region
          _
        $region28: #{potential_forward.1} parent=11 // pred_fallthru
          _
        // Predicated region
        $region29: #{potential_forward.1} parent=11 // pred_check
          %p332 = pneg %p194
        $region30: #{potential_forward.1} parent=11 // pred_check_branch
          %334 = sbr.rel (%p332) target = $region32
        $region31: #{potential_forward.1} parent=11 // pred_region
          %s336 = ssub.s32 2048, 2048
          %337 = vsyncadd [#allocation6], %s336
          %s338 = sshll.u32 [#allocation7], 4
          %s339 = int_to_ptr.vmem [resolvable:$true] %s338
          %344 = dma.hbm_to_vmem [thread:$0]  %s6, 2048, %s339, [#allocation6], 128, 128, 8
        $region32: #{potential_forward.1} parent=11 // pred_fallthru
          _
        // Predicated region
        $region33: #{potential_forward.1} parent=11 // pred_check
          %p345 = pneg %p215
        $region34: #{potential_forward.1} parent=11 // pred_check_branch
          %347 = sbr.rel (%p345) target = $region36
        $region35: #{potential_forward.1} parent=11 // pred_region
          _
        $region36: #{potential_forward.1} parent=11 // pred_fallthru
          _
        // Predicated region
        $region37: #{potential_forward.1} parent=11 // pred_check
          %p348 = pneg %p236
        $region38: #{potential_forward.1} parent=11 // pred_check_branch
          %350 = sbr.rel (%p348) target = $region40
        $region39: #{potential_forward.1} parent=11 // pred_region
          _
        $region40: #{potential_forward.1} parent=11 // pred_fallthru
          _
        // Predicated region
        $region41: #{potential_forward.1} parent=11 // pred_check
          %p351 = pneg %p257
        $region42: #{potential_forward.1} parent=11 // pred_check_branch
          %353 = sbr.rel (%p351) target = $region44
        $region43: #{potential_forward.1} parent=11 // pred_region
          _
        $region44: #{potential_forward.1} parent=11 // pred_fallthru
          _
      $region12: #{potential_forward.1} parent=5 // pred_fallthru
        _
      %p354 = scmp.lt.s32.totalorder %s21, 2
      // Predicated region
      $region45: #{potential_forward.1} parent=5 // pred_check
        %p355 = pneg %p354
      $region46: #{potential_forward.1} parent=5 // pred_check_branch
        %357 = sbr.rel (%p355) target = $region48
      $region47: #{potential_forward.1} parent=5 // pred_region
        // Predicated region
        $region49: #{potential_forward.1} parent=47 // pred_check
          %p358 = pneg %p55
        $region50: #{potential_forward.1} parent=47 // pred_check_branch
          %360 = sbr.rel (%p358) target = $region52
        $region51: #{potential_forward.1} parent=47 // pred_region
          %p361 = scmp.lt.s32.totalorder %s28, 1
          %s362 = scalar_select %p361, %s28, 1
          %p363 = scmp.lt.s32.totalorder %s29, 0
          %s364 = scalar_select %p363, %s29, 0
          %s365 = sadd.s32 %s364, %s362
          %s366 = smul.addr %s365, 8
          %s367 = scalar_lea.vmem %s0, %s366
        $region52: #{potential_forward.1} parent=47 // pred_fallthru
          _
        // Predicated region
        $region53: #{potential_forward.1} parent=47 // pred_check
          %p368 = pneg %p83
        $region54: #{potential_forward.1} parent=47 // pred_check_branch
          %370 = sbr.rel (%p368) target = $region56
        $region55: #{potential_forward.1} parent=47 // pred_region
          %p371 = scmp.lt.s32.totalorder %s28, 1
          %s372 = scalar_select %p371, %s28, 1
          %p373 = scmp.lt.s32.totalorder %s29, 0
          %s374 = scalar_select %p373, %s29, 0
          %s375 = smul.addr %s374, 2
          %s376 = smul.addr %s372, 2
          %s377 = sadd.s32 %s375, %s376
          %s378 = smul.addr %s377, 8
          %s379 = scalar_lea.vmem %s1, %s378
        $region56: #{potential_forward.1} parent=47 // pred_fallthru
          _
      $region48: #{potential_forward.1} parent=5 // pred_fallthru
        _
      %p380 = scmp.le.s32.totalorder 1, %s21
      %p381 = scmp.lt.s32.totalorder %s21, 3
      %p382 = pnand %p380, %p381
      %p383 = pneg %p382
      // Predicated region
      $region57: #{potential_forward.1} parent=5 // pred_check
        _
      $region58: #{potential_forward.1} parent=5 // pred_check_branch
        %385 = sbr.rel (%p382) target = $region60
      $region59: #{potential_forward.1} parent=5 // pred_region
        %s386 = ssub.s32 %s21, 1
        // Predicated region
        $region61: #{potential_forward.1} parent=59 // pred_check
          %p387 = pneg %p110
        $region62: #{potential_forward.1} parent=59 // pred_check_branch
          %389 = sbr.rel (%p387) target = $region64
        $region63: #{potential_forward.1} parent=59 // pred_region
          %390 = dma.done [#allocation3], 4096
        $region64: #{potential_forward.1} parent=59 // pred_fallthru
          _
        // Predicated region
        $region65: #{potential_forward.1} parent=59 // pred_check
          %p391 = pneg %p152
        $region66: #{potential_forward.1} parent=59 // pred_check_branch
          %393 = sbr.rel (%p391) target = $region68
        $region67: #{potential_forward.1} parent=59 // pred_region
          %394 = dma.done [#allocation6], 4096
        $region68: #{potential_forward.1} parent=59 // pred_fallthru
          _
        // Predicated region
        $region69: #{potential_forward.1} parent=59 // pred_check
          %p395 = pneg %p194
        $region70: #{potential_forward.1} parent=59 // pred_check_branch
          %397 = sbr.rel (%p395) target = $region72
        $region71: #{potential_forward.1} parent=59 // pred_region
          %398 = dma.done [#allocation6], 2048
        $region72: #{potential_forward.1} parent=59 // pred_fallthru
          _
        %p399 = scmp.lt.s32.totalorder %s30, 1
        %s400 = scalar_select %p399, %s30, 1
        %p401 = scmp.lt.s32.totalorder %s31, 0
        %s402 = scalar_select %p401, %s31, 0
        %s403 = sadd.s32 %s402, %s400
        %s404 = smul.addr %s403, 8
        %s405 = scalar_lea.vmem %s0, %s404
        %p406 = pneg %p61
        %p407 = pneg %p58
        %p408 = scmp.lt.s32.totalorder %s30, 1
        %s409 = scalar_select %p408, %s30, 1
        %p410 = scmp.lt.s32.totalorder %s31, 0
        %s411 = scalar_select %p410, %s31, 0
        %s412 = smul.addr %s411, 2
        %s413 = smul.addr %s409, 2
        %s414 = sadd.s32 %s412, %s413
        %s415 = smul.addr %s414, 8
        %s416 = scalar_lea.vmem %s1, %s415
        %p417 = pneg %p89
        %p418 = pneg %p86
        %p419 = pneg %p110
        %p420 = pneg %p107
        %p421 = pneg %p131
        %p422 = pneg %p128
        %p423 = pneg %p152
        %p424 = pneg %p149
        %p425 = pneg %p173
        %p426 = pneg %p170
        %p427 = pneg %p194
        %p428 = pneg %p191
        %p429 = pneg %p215
        %p430 = pneg %p212
        %p431 = pneg %p236
        %p432 = pneg %p233
        %p433 = pneg %p257
        %p434 = pneg %p254
        %p435 = pneg %p285
        %p436 = pneg %p282
        %s437 = sand.u32 %s272, 1
        %s438 = scalar_lea.sflag [#allocation4], %s437
        %s439 = sand.u32 %s272, 1
        %s440 = smul.addr %s439, 8
        %s441 = scalar_lea.vmem [#allocation8], %s440
        %p442 = scmp.lt.s32.totalorder %s30, 1
        %s443 = scalar_select %p442, %s30, 1
        %p444 = scmp.lt.s32.totalorder %s31, 0
        %s445 = scalar_select %p444, %s31, 0
        %s446 = sadd.s32 %s445, %s443
        %s447 = smul.addr %s446, 8
        %s448 = scalar_lea.vmem %s0, %s447
        %p449 = scmp.lt.s32.totalorder %s30, 1
        %s450 = scalar_select %p449, %s30, 1
        %p451 = scmp.lt.s32.totalorder %s31, 0
        %s452 = scalar_select %p451, %s31, 0
        %s453 = smul.addr %s452, 2
        %s454 = smul.addr %s450, 2
        %s455 = sadd.s32 %s453, %s454
        %s456 = smul.addr %s455, 8
        %s457 = scalar_lea.vmem %s1, %s456
        %s458 = smul.u32 %s31, 8
        %v459 = vld [vmem:[%s448] sm:$0xff]
        %v460 = vld [vmem:[%s457] sm:$0xff]
        %v461 = vld [vmem:[%s457 + $0x8] sm:$0xff]
        %v462 = vld [vmem:[#allocation2] sm:$0xff]
        %v463 = vld [vmem:[#allocation2 + $0x8] sm:$0xff]
        %v464 = vld [vmem:[#allocation2 + $0x10] sm:$0xff]
        %v465 = vld [vmem:[#allocation2 + $0x18] sm:$0xff]
        %v466 = vld [vmem:[#allocation2 + $0x20] sm:$0xff]
        %v467 = vld [vmem:[#allocation2 + $0x28] sm:$0xff]
        %v468 = vld [vmem:[#allocation2 + $0x30] sm:$0xff]
        %v469 = vld [vmem:[#allocation2 + $0x38] sm:$0xff]
        %v470 = vld [vmem:[#allocation2 + $0x40] sm:$0xff]
        %v471 = vld [vmem:[#allocation2 + $0x48] sm:$0xff]
        %v472 = vld [vmem:[#allocation2 + $0x50] sm:$0xff]
        %v473 = vld [vmem:[#allocation2 + $0x58] sm:$0xff]
        %v474 = vld [vmem:[#allocation2 + $0x60] sm:$0xff]
        %v475 = vld [vmem:[#allocation2 + $0x68] sm:$0xff]
        %v476 = vld [vmem:[#allocation2 + $0x70] sm:$0xff]
        %v477 = vld [vmem:[#allocation2 + $0x78] sm:$0xff]
        %v478 = vld [vmem:[#allocation2 + $0x80] sm:$0xff]
        %v479 = vld [vmem:[#allocation2 + $0x88] sm:$0xff]
        %v480 = vld [vmem:[#allocation2 + $0x90] sm:$0xff]
        %v481 = vld [vmem:[#allocation2 + $0x98] sm:$0xff]
        %v482 = vld [vmem:[#allocation2 + $0xa0] sm:$0xff]
        %v483 = vld [vmem:[#allocation2 + $0xa8] sm:$0xff]
        %v484 = vld [vmem:[#allocation2 + $0xb0] sm:$0xff]
        %v485 = vld [vmem:[#allocation2 + $0xb8] sm:$0xff]
        %v486 = vld [vmem:[#allocation2 + $0xc0] sm:$0xff]
        %v487 = vld [vmem:[#allocation2 + $0xc8] sm:$0xff]
        %v488 = vld [vmem:[#allocation2 + $0xd0] sm:$0xff]
        %v489 = vld [vmem:[#allocation2 + $0xd8] sm:$0xff]
        %v490 = vld [vmem:[#allocation2 + $0xe0] sm:$0xff]
        %v491 = vld [vmem:[#allocation2 + $0xe8] sm:$0xff]
        %v492 = vld [vmem:[#allocation2 + $0xf0] sm:$0xff]
        %v493 = vld [vmem:[#allocation2 + $0xf8] sm:$0xff]
        %v494 = vld [vmem:[%s3] sm:$0x3]
        %v496 = vlaneseq
        %v497 = vshrl.u32 %v496, 7
        %v498 = vsub.s32 0, %v497
        %v499 = vrot.slane %v494, %v498
        %v500 = vlaneseq
        %v501 = vshrl.u32 %v500, 7
        %v502 = vsub.s32 1, %v501
        %v503 = vrot.slane %v494, %v502
        %506 = vmatprep.subr.mxu0 %v463
        %507 = vmatpush1.msra.mxu0 %v462
        %508 = vmatprep.subr.mxu0 %v465
        %509 = vmatpush1.msra.mxu0 %v464
        %510 = vmatprep.subr.mxu0 %v467
        %511 = vmatpush1.msra.mxu0 %v466
        %512 = vmatprep.subr.mxu0 %v469
        %513 = vmatpush1.msra.mxu0 %v468
        %514 = vmatprep.subr.mxu0 %v471
        %515 = vmatpush1.msra.mxu0 %v470
        %516 = vmatprep.subr.mxu0 %v473
        %517 = vmatpush1.msra.mxu0 %v472
        %518 = vmatprep.subr.mxu0 %v475
        %519 = vmatpush1.msra.mxu0 %v474
        %520 = vmatprep.subr.mxu0 %v477
        %521 = vmatpush1.msra.mxu0 %v476
        %522 = vmatprep.subr.mxu0 %v479
        %523 = vmatpush1.msra.mxu0 %v478
        %524 = vmatprep.subr.mxu0 %v481
        %525 = vmatpush1.msra.mxu0 %v480
        %526 = vmatprep.subr.mxu0 %v483
        %527 = vmatpush1.msra.mxu0 %v482
        %528 = vmatprep.subr.mxu0 %v485
        %529 = vmatpush1.msra.mxu0 %v484
        %530 = vmatprep.subr.mxu0 %v487
        %531 = vmatpush1.msra.mxu0 %v486
        %532 = vmatprep.subr.mxu0 %v489
        %533 = vmatpush1.msra.mxu0 %v488
        %534 = vmatprep.subr.mxu0 %v491
        %535 = vmatpush1.msra.mxu0 %v490
        %536 = vmatprep.subr.mxu0 %v493
        %537 = vmatpush1.msra.mxu0 %v492
        %538 = vmatprep.subr.mxu0 0.0
        %539 = vmatpush1.msra.mxu0 0.0
        %540 = vmatprep.subr.mxu0 0.0
        %541 = vmatpush1.msra.mxu0 0.0
        %542 = vmatprep.subr.mxu0 0.0
        %543 = vmatpush1.msra.mxu0 0.0
        %544 = vmatprep.subr.mxu0 0.0
        %545 = vmatpush1.msra.mxu0 0.0
        %546 = vmatprep.subr.mxu0 0.0
        %547 = vmatpush1.msra.mxu0 0.0
        %548 = vmatprep.subr.mxu0 0.0
        %549 = vmatpush1.msra.mxu0 0.0
        %550 = vmatprep.subr.mxu0 0.0
        %551 = vmatpush1.msra.mxu0 0.0
        %552 = vmatprep.subr.mxu0 0.0
        %553 = vmatpush1.msra.mxu0 0.0
        %554 = vmatprep.subr.mxu0 0.0
        %555 = vmatpush1.msra.mxu0 0.0
        %556 = vmatprep.subr.mxu0 0.0
        %557 = vmatpush1.msra.mxu0 0.0
        %558 = vmatprep.subr.mxu0 0.0
        %559 = vmatpush1.msra.mxu0 0.0
        %560 = vmatprep.subr.mxu0 0.0
        %561 = vmatpush1.msra.mxu0 0.0
        %562 = vmatprep.subr.mxu0 0.0
        %563 = vmatpush1.msra.mxu0 0.0
        %564 = vmatprep.subr.mxu0 0.0
        %565 = vmatpush1.msra.mxu0 0.0
        %566 = vmatprep.subr.mxu0 0.0
        %567 = vmatpush1.msra.mxu0 0.0
        %568 = vmatprep.subr.mxu0 0.0
        %569 = vmatpush1.msra.mxu0 0.0
        %570 = vmatprep.mubr.f32.mxu0 0.0
        %571 = vmatmul.mubr.f32.gmra.mrb[0].mxu0 %v459
        %v572 = vpop.f32.mrb[0].mxu0
        %v573 = vadd.f32 %v499, %v572
        %v574 = vpop.f32.mrb[0].mxu0
        %v575 = vadd.f32 %v503, %v574
        %576 = vdwg.mxu0
        %v577 = vld [vmem:[#allocation5] sm:$0xff]
        %v578 = vld [vmem:[#allocation5 + $0x8] sm:$0xff]
        %v579 = vld [vmem:[#allocation5 + $0x10] sm:$0xff]
        %v580 = vld [vmem:[#allocation5 + $0x18] sm:$0xff]
        %v581 = vld [vmem:[#allocation5 + $0x20] sm:$0xff]
        %v582 = vld [vmem:[#allocation5 + $0x28] sm:$0xff]
        %v583 = vld [vmem:[#allocation5 + $0x30] sm:$0xff]
        %v584 = vld [vmem:[#allocation5 + $0x38] sm:$0xff]
        %v585 = vld [vmem:[#allocation5 + $0x40] sm:$0xff]
        %v586 = vld [vmem:[#allocation5 + $0x48] sm:$0xff]
        %v587 = vld [vmem:[#allocation5 + $0x50] sm:$0xff]
        %v588 = vld [vmem:[#allocation5 + $0x58] sm:$0xff]
        %v589 = vld [vmem:[#allocation5 + $0x60] sm:$0xff]
        %v590 = vld [vmem:[#allocation5 + $0x68] sm:$0xff]
        %v591 = vld [vmem:[#allocation5 + $0x70] sm:$0xff]
        %v592 = vld [vmem:[#allocation5 + $0x78] sm:$0xff]
        %v593 = vld [vmem:[#allocation5 + $0x80] sm:$0xff]
        %v594 = vld [vmem:[#allocation5 + $0x88] sm:$0xff]
        %v595 = vld [vmem:[#allocation5 + $0x90] sm:$0xff]
        %v596 = vld [vmem:[#allocation5 + $0x98] sm:$0xff]
        %v597 = vld [vmem:[#allocation5 + $0xa0] sm:$0xff]
        %v598 = vld [vmem:[#allocation5 + $0xa8] sm:$0xff]
        %v599 = vld [vmem:[#allocation5 + $0xb0] sm:$0xff]
        %v600 = vld [vmem:[#allocation5 + $0xb8] sm:$0xff]
        %v601 = vld [vmem:[#allocation5 + $0xc0] sm:$0xff]
        %v602 = vld [vmem:[#allocation5 + $0xc8] sm:$0xff]
        %v603 = vld [vmem:[#allocation5 + $0xd0] sm:$0xff]
        %v604 = vld [vmem:[#allocation5 + $0xd8] sm:$0xff]
        %v605 = vld [vmem:[#allocation5 + $0xe0] sm:$0xff]
        %v606 = vld [vmem:[#allocation5 + $0xe8] sm:$0xff]
        %v607 = vld [vmem:[#allocation5 + $0xf0] sm:$0xff]
        %v608 = vld [vmem:[#allocation5 + $0xf8] sm:$0xff]
        %v609 = vld [vmem:[%s5] sm:$0x3]
        %v611 = vlaneseq
        %v612 = vshrl.u32 %v611, 7
        %v613 = vsub.s32 0, %v612
        %v614 = vrot.slane %v609, %v613
        %v615 = vlaneseq
        %v616 = vshrl.u32 %v615, 7
        %v617 = vsub.s32 1, %v616
        %v618 = vrot.slane %v609, %v617
        %621 = vmatprep.subr.mxu0 %v578
        %622 = vmatpush1.msra.mxu0 %v577
        %623 = vmatprep.subr.mxu0 %v580
        %624 = vmatpush1.msra.mxu0 %v579
        %625 = vmatprep.subr.mxu0 %v582
        %626 = vmatpush1.msra.mxu0 %v581
        %627 = vmatprep.subr.mxu0 %v584
        %628 = vmatpush1.msra.mxu0 %v583
        %629 = vmatprep.subr.mxu0 %v586
        %630 = vmatpush1.msra.mxu0 %v585
        %631 = vmatprep.subr.mxu0 %v588
        %632 = vmatpush1.msra.mxu0 %v587
        %633 = vmatprep.subr.mxu0 %v590
        %634 = vmatpush1.msra.mxu0 %v589
        %635 = vmatprep.subr.mxu0 %v592
        %636 = vmatpush1.msra.mxu0 %v591
        %637 = vmatprep.subr.mxu0 %v594
        %638 = vmatpush1.msra.mxu0 %v593
        %639 = vmatprep.subr.mxu0 %v596
        %640 = vmatpush1.msra.mxu0 %v595
        %641 = vmatprep.subr.mxu0 %v598
        %642 = vmatpush1.msra.mxu0 %v597
        %643 = vmatprep.subr.mxu0 %v600
        %644 = vmatpush1.msra.mxu0 %v599
        %645 = vmatprep.subr.mxu0 %v602
        %646 = vmatpush1.msra.mxu0 %v601
        %647 = vmatprep.subr.mxu0 %v604
        %648 = vmatpush1.msra.mxu0 %v603
        %649 = vmatprep.subr.mxu0 %v606
        %650 = vmatpush1.msra.mxu0 %v605
        %651 = vmatprep.subr.mxu0 %v608
        %652 = vmatpush1.msra.mxu0 %v607
        %653 = vmatprep.subr.mxu0 0.0
        %654 = vmatpush1.msra.mxu0 0.0
        %655 = vmatprep.subr.mxu0 0.0
        %656 = vmatpush1.msra.mxu0 0.0
        %657 = vmatprep.subr.mxu0 0.0
        %658 = vmatpush1.msra.mxu0 0.0
        %659 = vmatprep.subr.mxu0 0.0
        %660 = vmatpush1.msra.mxu0 0.0
        %661 = vmatprep.subr.mxu0 0.0
        %662 = vmatpush1.msra.mxu0 0.0
        %663 = vmatprep.subr.mxu0 0.0
        %664 = vmatpush1.msra.mxu0 0.0
        %665 = vmatprep.subr.mxu0 0.0
        %666 = vmatpush1.msra.mxu0 0.0
        %667 = vmatprep.subr.mxu0 0.0
        %668 = vmatpush1.msra.mxu0 0.0
        %669 = vmatprep.subr.mxu0 0.0
        %670 = vmatpush1.msra.mxu0 0.0
        %671 = vmatprep.subr.mxu0 0.0
        %672 = vmatpush1.msra.mxu0 0.0
        %673 = vmatprep.subr.mxu0 0.0
        %674 = vmatpush1.msra.mxu0 0.0
        %675 = vmatprep.subr.mxu0 0.0
        %676 = vmatpush1.msra.mxu0 0.0
        %677 = vmatprep.subr.mxu0 0.0
        %678 = vmatpush1.msra.mxu0 0.0
        %679 = vmatprep.subr.mxu0 0.0
        %680 = vmatpush1.msra.mxu0 0.0
        %681 = vmatprep.subr.mxu0 0.0
        %682 = vmatpush1.msra.mxu0 0.0
        %683 = vmatprep.subr.mxu0 0.0
        %684 = vmatpush1.msra.mxu0 0.0
        %685 = vmatprep.mubr.f32.mxu0 0.0
        %686 = vmatmul.mubr.f32.gmra.mrb[0].mxu0 %v459
        %v687 = vpop.f32.mrb[0].mxu0
        %v688 = vadd.f32 %v614, %v687
        %v689 = vpop.f32.mrb[0].mxu0
        %v690 = vadd.f32 %v618, %v689
        %691 = vdwg.mxu0
        %692 = vmatprep.subr.mxu0 %v578
        %693 = vmatpush1.msra.mxu0 %v577
        %694 = vmatprep.subr.mxu0 %v580
        %695 = vmatpush1.msra.mxu0 %v579
        %696 = vmatprep.subr.mxu0 %v582
        %697 = vmatpush1.msra.mxu0 %v581
        %698 = vmatprep.subr.mxu0 %v584
        %699 = vmatpush1.msra.mxu0 %v583
        %700 = vmatprep.subr.mxu0 %v586
        %701 = vmatpush1.msra.mxu0 %v585
        %702 = vmatprep.subr.mxu0 %v588
        %703 = vmatpush1.msra.mxu0 %v587
        %704 = vmatprep.subr.mxu0 %v590
        %705 = vmatpush1.msra.mxu0 %v589
        %706 = vmatprep.subr.mxu0 %v592
        %707 = vmatpush1.msra.mxu0 %v591
        %708 = vmatprep.subr.mxu0 %v594
        %709 = vmatpush1.msra.mxu0 %v593
        %710 = vmatprep.subr.mxu0 %v596
        %711 = vmatpush1.msra.mxu0 %v595
        %712 = vmatprep.subr.mxu0 %v598
        %713 = vmatpush1.msra.mxu0 %v597
        %714 = vmatprep.subr.mxu0 %v600
        %715 = vmatpush1.msra.mxu0 %v599
        %716 = vmatprep.subr.mxu0 %v602
        %717 = vmatpush1.msra.mxu0 %v601
        %718 = vmatprep.subr.mxu0 %v604
        %719 = vmatpush1.msra.mxu0 %v603
        %720 = vmatprep.subr.mxu0 %v606
        %721 = vmatpush1.msra.mxu0 %v605
        %722 = vmatprep.subr.mxu0 %v608
        %723 = vmatpush1.msra.mxu0 %v607
        %724 = vmatprep.subr.mxu0 0.0
        %725 = vmatpush1.msra.mxu0 0.0
        %726 = vmatprep.subr.mxu0 0.0
        %727 = vmatpush1.msra.mxu0 0.0
        %728 = vmatprep.subr.mxu0 0.0
        %729 = vmatpush1.msra.mxu0 0.0
        %730 = vmatprep.subr.mxu0 0.0
        %731 = vmatpush1.msra.mxu0 0.0
        %732 = vmatprep.subr.mxu0 0.0
        %733 = vmatpush1.msra.mxu0 0.0
        %734 = vmatprep.subr.mxu0 0.0
        %735 = vmatpush1.msra.mxu0 0.0
        %736 = vmatprep.subr.mxu0 0.0
        %737 = vmatpush1.msra.mxu0 0.0
        %738 = vmatprep.subr.mxu0 0.0
        %739 = vmatpush1.msra.mxu0 0.0
        %740 = vmatprep.subr.mxu0 0.0
        %741 = vmatpush1.msra.mxu0 0.0
        %742 = vmatprep.subr.mxu0 0.0
        %743 = vmatpush1.msra.mxu0 0.0
        %744 = vmatprep.subr.mxu0 0.0
        %745 = vmatpush1.msra.mxu0 0.0
        %746 = vmatprep.subr.mxu0 0.0
        %747 = vmatpush1.msra.mxu0 0.0
        %748 = vmatprep.subr.mxu0 0.0
        %749 = vmatpush1.msra.mxu0 0.0
        %750 = vmatprep.subr.mxu0 0.0
        %751 = vmatpush1.msra.mxu0 0.0
        %752 = vmatprep.subr.mxu0 0.0
        %753 = vmatpush1.msra.mxu0 0.0
        %754 = vmatprep.subr.mxu0 0.0
        %755 = vmatpush1.msra.mxu0 0.0
        %756 = vmatprep.mubr.f32.mxu0 0.0
        %757 = vmatmul.mubr.f32.gmra.mrb[0].mxu0 %v460
        %v758 = vpop.f32.mrb[0].mxu0
        %v759 = vadd.f32 %v614, %v758
        %v760 = vpop.f32.mrb[0].mxu0
        %v761 = vadd.f32 %v618, %v760
        %762 = vmatprep.mubr.f32.mxu0 0.0
        %763 = vmatmul.mubr.f32.gmra.mrb[0].mxu0 %v461
        %v764 = vpop.f32.mrb[0].mxu0
        %v765 = vadd.f32 %v614, %v764
        %v766 = vpop.f32.mrb[0].mxu0
        %v767 = vadd.f32 %v618, %v766
        %768 = vdwg.mxu0
        %769 = vmatprep.subr.mxu0 0.0
        %770 = vmatpush1.xpose.msra.mxu0 %v688
        %771 = vmatprep.subr.mxu0 0.0
        %772 = vmatpush1.xpose.msra.mxu0 0.0
        %773 = vmatprep.subr.mxu0 0.0
        %774 = vmatpush1.xpose.msra.mxu0 0.0
        %775 = vmatprep.subr.mxu0 0.0
        %776 = vmatpush1.xpose.msra.mxu0 0.0
        %777 = vmatprep.subr.mxu0 0.0
        %778 = vmatpush1.xpose.msra.mxu0 0.0
        %779 = vmatprep.subr.mxu0 0.0
        %780 = vmatpush1.xpose.msra.mxu0 0.0
        %781 = vmatprep.subr.mxu0 0.0
        %782 = vmatpush1.xpose.msra.mxu0 0.0
        %783 = vmatprep.subr.mxu0 0.0
        %784 = vmatpush1.xpose.msra.mxu0 0.0
        %785 = vmatprep.subr.mxu0 0.0
        %786 = vmatpush1.xpose.msra.mxu0 0.0
        %787 = vmatprep.subr.mxu0 0.0
        %788 = vmatpush1.xpose.msra.mxu0 0.0
        %789 = vmatprep.subr.mxu0 0.0
        %790 = vmatpush1.xpose.msra.mxu0 0.0
        %791 = vmatprep.subr.mxu0 0.0
        %792 = vmatpush1.xpose.msra.mxu0 0.0
        %793 = vmatprep.subr.mxu0 0.0
        %794 = vmatpush1.xpose.msra.mxu0 0.0
        %795 = vmatprep.subr.mxu0 0.0
        %796 = vmatpush1.xpose.msra.mxu0 0.0
        %797 = vmatprep.subr.mxu0 0.0
        %798 = vmatpush1.xpose.msra.mxu0 0.0
        %799 = vmatprep.subr.mxu0 0.0
        %800 = vmatpush1.xpose.msra.mxu0 0.0
        %801 = vmatprep.subr.mxu0 0.0
        %802 = vmatpush1.xpose.msra.mxu0 0.0
        %803 = vmatprep.subr.mxu0 0.0
        %804 = vmatpush1.xpose.msra.mxu0 0.0
        %805 = vmatprep.subr.mxu0 0.0
        %806 = vmatpush1.xpose.msra.mxu0 0.0
        %807 = vmatprep.subr.mxu0 0.0
        %808 = vmatpush1.xpose.msra.mxu0 0.0
        %809 = vmatprep.subr.mxu0 0.0
        %810 = vmatpush1.xpose.msra.mxu0 0.0
        %811 = vmatprep.subr.mxu0 0.0
        %812 = vmatpush1.xpose.msra.mxu0 0.0
        %813 = vmatprep.subr.mxu0 0.0
        %814 = vmatpush1.xpose.msra.mxu0 0.0
        %815 = vmatprep.subr.mxu0 0.0
        %816 = vmatpush1.xpose.msra.mxu0 0.0
        %817 = vmatprep.subr.mxu0 0.0
        %818 = vmatpush1.xpose.msra.mxu0 0.0
        %819 = vmatprep.subr.mxu0 0.0
        %820 = vmatpush1.xpose.msra.mxu0 0.0
        %821 = vmatprep.subr.mxu0 0.0
        %822 = vmatpush1.xpose.msra.mxu0 0.0
        %823 = vmatprep.subr.mxu0 0.0
        %824 = vmatpush1.xpose.msra.mxu0 0.0
        %825 = vmatprep.subr.mxu0 0.0
        %826 = vmatpush1.xpose.msra.mxu0 0.0
        %827 = vmatprep.subr.mxu0 0.0
        %828 = vmatpush1.xpose.msra.mxu0 0.0
        %829 = vmatprep.subr.mxu0 0.0
        %830 = vmatpush1.xpose.msra.mxu0 0.0
        %831 = vmatprep.subr.mxu0 0.0
        %832 = vmatpush1.xpose.msra.mxu0 0.0
        %833 = vmatprep.mubr.f32.mxu0 0.0
        %834 = vmatmul.mubr.f32.gmra.mrb[0].mxu0 %v573
        %v835 = vpop.f32.mrb[0].mxu0
        %v836 = vadd.f32 0.0, %v835
        %v837 = vpop.f32.mrb[0].mxu0
        %838 = vdwg.mxu0
        %v839 = vmul.f32 %v836, 0.17677669
        %840 = vmatprep.subr.mxu0 0.0
        %841 = vmatpush1.xpose.msra.mxu0 %v759
        %842 = vmatprep.subr.mxu0 0.0
        %843 = vmatpush1.xpose.msra.mxu0 %v765
        %844 = vmatprep.subr.mxu0 0.0
        %845 = vmatpush1.xpose.msra.mxu0 0.0
        %846 = vmatprep.subr.mxu0 0.0
        %847 = vmatpush1.xpose.msra.mxu0 0.0
        %848 = vmatprep.subr.mxu0 0.0
        %849 = vmatpush1.xpose.msra.mxu0 0.0
        %850 = vmatprep.subr.mxu0 0.0
        %851 = vmatpush1.xpose.msra.mxu0 0.0
        %852 = vmatprep.subr.mxu0 0.0
        %853 = vmatpush1.xpose.msra.mxu0 0.0
        %854 = vmatprep.subr.mxu0 0.0
        %855 = vmatpush1.xpose.msra.mxu0 0.0
        %856 = vmatprep.subr.mxu0 0.0
        %857 = vmatpush1.xpose.msra.mxu0 0.0
        %858 = vmatprep.subr.mxu0 0.0
        %859 = vmatpush1.xpose.msra.mxu0 0.0
        %860 = vmatprep.subr.mxu0 0.0
        %861 = vmatpush1.xpose.msra.mxu0 0.0
        %862 = vmatprep.subr.mxu0 0.0
        %863 = vmatpush1.xpose.msra.mxu0 0.0
        %864 = vmatprep.subr.mxu0 0.0
        %865 = vmatpush1.xpose.msra.mxu0 0.0
        %866 = vmatprep.subr.mxu0 0.0
        %867 = vmatpush1.xpose.msra.mxu0 0.0
        %868 = vmatprep.subr.mxu0 0.0
        %869 = vmatpush1.xpose.msra.mxu0 0.0
        %870 = vmatprep.subr.mxu0 0.0
        %871 = vmatpush1.xpose.msra.mxu0 0.0
        %872 = vmatprep.subr.mxu0 0.0
        %873 = vmatpush1.xpose.msra.mxu0 0.0
        %874 = vmatprep.subr.mxu0 0.0
        %875 = vmatpush1.xpose.msra.mxu0 0.0
        %876 = vmatprep.subr.mxu0 0.0
        %877 = vmatpush1.xpose.msra.mxu0 0.0
        %878 = vmatprep.subr.mxu0 0.0
        %879 = vmatpush1.xpose.msra.mxu0 0.0
        %880 = vmatprep.subr.mxu0 0.0
        %881 = vmatpush1.xpose.msra.mxu0 0.0
        %882 = vmatprep.subr.mxu0 0.0
        %883 = vmatpush1.xpose.msra.mxu0 0.0
        %884 = vmatprep.subr.mxu0 0.0
        %885 = vmatpush1.xpose.msra.mxu0 0.0
        %886 = vmatprep.subr.mxu0 0.0
        %887 = vmatpush1.xpose.msra.mxu0 0.0
        %888 = vmatprep.subr.mxu0 0.0
        %889 = vmatpush1.xpose.msra.mxu0 0.0
        %890 = vmatprep.subr.mxu0 0.0
        %891 = vmatpush1.xpose.msra.mxu0 0.0
        %892 = vmatprep.subr.mxu0 0.0
        %893 = vmatpush1.xpose.msra.mxu0 0.0
        %894 = vmatprep.subr.mxu0 0.0
        %895 = vmatpush1.xpose.msra.mxu0 0.0
        %896 = vmatprep.subr.mxu0 0.0
        %897 = vmatpush1.xpose.msra.mxu0 0.0
        %898 = vmatprep.subr.mxu0 0.0
        %899 = vmatpush1.xpose.msra.mxu0 0.0
        %900 = vmatprep.subr.mxu0 0.0
        %901 = vmatpush1.xpose.msra.mxu0 0.0
        %902 = vmatprep.subr.mxu0 0.0
        %903 = vmatpush1.xpose.msra.mxu0 0.0
        %904 = vmatprep.mubr.f32.mxu0 0.0
        %905 = vmatmul.mubr.f32.gmra.mrb[0].mxu0 %v573
        %v906 = vpop.f32.mrb[0].mxu0
        %v907 = vadd.f32 0.0, %v906
        %v908 = vpop.f32.mrb[0].mxu0
        %909 = vdwg.mxu0
        %v910 = vmul.f32 %v907, 0.17677669
        %v911 = vlaneseq
        %v912 = vshrl.u32 %v911, 7
        %v913 = vstv %s458
        %v914 = vadd.s32 %v913, %v912
        %v915 = vlaneseq
        %v916 = vand.u32 %v915, 127
        %v917 = vadd.s32 %v913, %v916
        %v918 = vsub.s32 %v914, %v917
        %vm919 = vcmp.lt.s32.totalorder %v918, 0
        %v920 = vsub.s32 0, %v918
        %v921 = vsel %vm919, %v920, %v918
        %vm922 = vcmp.le.s32.totalorder %v921, 4
        %v923 = vsel %vm922, %v839, -1e+30
        %vm924 = vcmp.lt.s32.totalorder %v916, 8
        %s925 = ssub.s32 %s458, 8
        %v926 = vstv %s925
        %v927 = vadd.s32 %v926, %v916
        %v928 = vsel %vm924, %v927, %v917
        %v929 = vsub.s32 %v914, %v928
        %vm930 = vcmp.lt.s32.totalorder %v929, 0
        %v931 = vsub.s32 0, %v929
        %v932 = vsel %vm930, %v931, %v929
        %vm933 = vcmp.le.s32.totalorder %v932, 4
        %vm934 = vcmp.ge.s32.totalorder %v928, 0
        %vm935 = vmand %vm933, %vm934
        %vm936 = vcmp.lt.s32.totalorder %v928, 8
        %vm937 = vmand %vm935, %vm936
        %v938 = vsel %vm937, %v910, -1e+30
        %vm939 = vcmask 64512
        %v940 = vsel %vm939, %v923, -inf
        %941 = vmax.xlane.f32.xlu0 %v940
        %v942 = vpop.xlane.xlu0 %941
        %vm943 = vcmask 130048
        %v944 = vsel %vm943, %v938, -inf
        %945 = vmax.xlane.f32.xlu0 %v944
        %v946 = vpop.xlane.xlu0 %945
        %v947 = vmax.f32 %v942, %v946
        %v948 = vsub.f32 %v923, %v947
        %v949 = vmul.f32 %v948, 1.442695
        %v950 = vpow.pop %v949
        %v951 = vsub.f32 %v938, %v947
        %v952 = vmul.f32 %v951, 1.442695
        %v953 = vpow.pop %v952
        %v954 = vsel %vm939, %v950, 0.0
        %955 = vadd.xlane.f32.xlu0 %v954
        %v956 = vpop.xlane.xlu0 %955
        %v957 = vsel %vm943, %v953, 0.0
        %958 = vadd.xlane.f32.xlu0 %v957
        %v959 = vpop.xlane.xlu0 %958
        %v960 = vadd.f32 %v956, %v959
        %v961 = vrcp.pop %v960
        %v962 = vmul.f32 %v950, %v961
        %v963 = vmul.f32 %v953, %v961
        %v965 = vsel %vm943, %v963, 0
        %967 = vmatprep.subr.mxu0 0.0
        %968 = vmatpush1.msra.mxu0 %v761
        %969 = vmatprep.subr.mxu0 0.0
        %970 = vmatpush1.msra.mxu0 %v767
        %971 = vmatprep.subr.mxu0 0.0
        %972 = vmatpush1.msra.mxu0 0.0
        %973 = vmatprep.subr.mxu0 0.0
        %974 = vmatpush1.msra.mxu0 0.0
        %975 = vmatprep.subr.mxu0 0.0
        %976 = vmatpush1.msra.mxu0 0.0
        %977 = vmatprep.subr.mxu0 0.0
        %978 = vmatpush1.msra.mxu0 0.0
        %979 = vmatprep.subr.mxu0 0.0
        %980 = vmatpush1.msra.mxu0 0.0
        %981 = vmatprep.subr.mxu0 0.0
        %982 = vmatpush1.msra.mxu0 0.0
        %983 = vmatprep.subr.mxu0 0.0
        %984 = vmatpush1.msra.mxu0 0.0
        %985 = vmatprep.subr.mxu0 0.0
        %986 = vmatpush1.msra.mxu0 0.0
        %987 = vmatprep.subr.mxu0 0.0
        %988 = vmatpush1.msra.mxu0 0.0
        %989 = vmatprep.subr.mxu0 0.0
        %990 = vmatpush1.msra.mxu0 0.0
        %991 = vmatprep.subr.mxu0 0.0
        %992 = vmatpush1.msra.mxu0 0.0
        %993 = vmatprep.subr.mxu0 0.0
        %994 = vmatpush1.msra.mxu0 0.0
        %995 = vmatprep.subr.mxu0 0.0
        %996 = vmatpush1.msra.mxu0 0.0
        %997 = vmatprep.subr.mxu0 0.0
        %998 = vmatpush1.msra.mxu0 0.0
        %999 = vmatprep.subr.mxu0 0.0
        %1000 = vmatpush1.msra.mxu0 0.0
        %1001 = vmatprep.subr.mxu0 0.0
        %1002 = vmatpush1.msra.mxu0 0.0
        %1003 = vmatprep.subr.mxu0 0.0
        %1004 = vmatpush1.msra.mxu0 0.0
        %1005 = vmatprep.subr.mxu0 0.0
        %1006 = vmatpush1.msra.mxu0 0.0
        %1007 = vmatprep.subr.mxu0 0.0
        %1008 = vmatpush1.msra.mxu0 0.0
        %1009 = vmatprep.subr.mxu0 0.0
        %1010 = vmatpush1.msra.mxu0 0.0
        %1011 = vmatprep.subr.mxu0 0.0
        %1012 = vmatpush1.msra.mxu0 0.0
        %1013 = vmatprep.subr.mxu0 0.0
        %1014 = vmatpush1.msra.mxu0 0.0
        %1015 = vmatprep.subr.mxu0 0.0
        %1016 = vmatpush1.msra.mxu0 0.0
        %1017 = vmatprep.subr.mxu0 0.0
        %1018 = vmatpush1.msra.mxu0 0.0
        %1019 = vmatprep.subr.mxu0 0.0
        %1020 = vmatpush1.msra.mxu0 0.0
        %1021 = vmatprep.subr.mxu0 0.0
        %1022 = vmatpush1.msra.mxu0 0.0
        %1023 = vmatprep.subr.mxu0 0.0
        %1024 = vmatpush1.msra.mxu0 0.0
        %1025 = vmatprep.subr.mxu0 0.0
        %1026 = vmatpush1.msra.mxu0 0.0
        %1027 = vmatprep.subr.mxu0 0.0
        %1028 = vmatpush1.msra.mxu0 0.0
        %1029 = vmatprep.subr.mxu0 0.0
        %1030 = vmatpush1.msra.mxu0 0.0
        %1031 = vmatprep.mubr.f32.mxu0 0.0
        %1032 = vmatmul.mubr.f32.gmra.mrb[0].mxu0 %v965
        %v1033 = vpop.f32.mrb[0].mxu0
        %v1034 = vadd.f32 0.0, %v1033
        %v1035 = vpop.f32.mrb[0].mxu0
        %1036 = vdwg.mxu0
        %v1038 = vsel %vm939, %v962, 0
        %1040 = vmatprep.subr.mxu0 0.0
        %1041 = vmatpush1.msra.mxu0 %v690
        %1042 = vmatprep.subr.mxu0 0.0
        %1043 = vmatpush1.msra.mxu0 0.0
        %1044 = vmatprep.subr.mxu0 0.0
        %1045 = vmatpush1.msra.mxu0 0.0
        %1046 = vmatprep.subr.mxu0 0.0
        %1047 = vmatpush1.msra.mxu0 0.0
        %1048 = vmatprep.subr.mxu0 0.0
        %1049 = vmatpush1.msra.mxu0 0.0
        %1050 = vmatprep.subr.mxu0 0.0
        %1051 = vmatpush1.msra.mxu0 0.0
        %1052 = vmatprep.subr.mxu0 0.0
        %1053 = vmatpush1.msra.mxu0 0.0
        %1054 = vmatprep.subr.mxu0 0.0
        %1055 = vmatpush1.msra.mxu0 0.0
        %1056 = vmatprep.subr.mxu0 0.0
        %1057 = vmatpush1.msra.mxu0 0.0
        %1058 = vmatprep.subr.mxu0 0.0
        %1059 = vmatpush1.msra.mxu0 0.0
        %1060 = vmatprep.subr.mxu0 0.0
        %1061 = vmatpush1.msra.mxu0 0.0
        %1062 = vmatprep.subr.mxu0 0.0
        %1063 = vmatpush1.msra.mxu0 0.0
        %1064 = vmatprep.subr.mxu0 0.0
        %1065 = vmatpush1.msra.mxu0 0.0
        %1066 = vmatprep.subr.mxu0 0.0
        %1067 = vmatpush1.msra.mxu0 0.0
        %1068 = vmatprep.subr.mxu0 0.0
        %1069 = vmatpush1.msra.mxu0 0.0
        %1070 = vmatprep.subr.mxu0 0.0
        %1071 = vmatpush1.msra.mxu0 0.0
        %1072 = vmatprep.subr.mxu0 0.0
        %1073 = vmatpush1.msra.mxu0 0.0
        %1074 = vmatprep.subr.mxu0 0.0
        %1075 = vmatpush1.msra.mxu0 0.0
        %1076 = vmatprep.subr.mxu0 0.0
        %1077 = vmatpush1.msra.mxu0 0.0
        %1078 = vmatprep.subr.mxu0 0.0
        %1079 = vmatpush1.msra.mxu0 0.0
        %1080 = vmatprep.subr.mxu0 0.0
        %1081 = vmatpush1.msra.mxu0 0.0
        %1082 = vmatprep.subr.mxu0 0.0
        %1083 = vmatpush1.msra.mxu0 0.0
        %1084 = vmatprep.subr.mxu0 0.0
        %1085 = vmatpush1.msra.mxu0 0.0
        %1086 = vmatprep.subr.mxu0 0.0
        %1087 = vmatpush1.msra.mxu0 0.0
        %1088 = vmatprep.subr.mxu0 0.0
        %1089 = vmatpush1.msra.mxu0 0.0
        %1090 = vmatprep.subr.mxu0 0.0
        %1091 = vmatpush1.msra.mxu0 0.0
        %1092 = vmatprep.subr.mxu0 0.0
        %1093 = vmatpush1.msra.mxu0 0.0
        %1094 = vmatprep.subr.mxu0 0.0
        %1095 = vmatpush1.msra.mxu0 0.0
        %1096 = vmatprep.subr.mxu0 0.0
        %1097 = vmatpush1.msra.mxu0 0.0
        %1098 = vmatprep.subr.mxu0 0.0
        %1099 = vmatpush1.msra.mxu0 0.0
        %1100 = vmatprep.subr.mxu0 0.0
        %1101 = vmatpush1.msra.mxu0 0.0
        %1102 = vmatprep.subr.mxu0 0.0
        %1103 = vmatpush1.msra.mxu0 0.0
        %1104 = vmatprep.mubr.f32.mxu0 0.0
        %1105 = vmatmul.mubr.f32.gmra.mrb[0].mxu0 %v1038
        %v1106 = vpop.f32.mrb[0].mxu0
        %v1107 = vadd.f32 %v1034, %v1106
        %v1108 = vpop.f32.mrb[0].mxu0
        %1109 = vdwg.mxu0
        %v1110 = vld [vmem:[#allocation7] sm:$0xff]
        %v1111 = vld [vmem:[#allocation7 + $0x8] sm:$0xff]
        %v1112 = vld [vmem:[#allocation7 + $0x10] sm:$0xff]
        %v1113 = vld [vmem:[#allocation7 + $0x18] sm:$0xff]
        %v1114 = vld [vmem:[#allocation7 + $0x20] sm:$0xff]
        %v1115 = vld [vmem:[#allocation7 + $0x28] sm:$0xff]
        %v1116 = vld [vmem:[#allocation7 + $0x30] sm:$0xff]
        %v1117 = vld [vmem:[#allocation7 + $0x38] sm:$0xff]
        %v1118 = vld [vmem:[#allocation7 + $0x40] sm:$0xff]
        %v1119 = vld [vmem:[#allocation7 + $0x48] sm:$0xff]
        %v1120 = vld [vmem:[#allocation7 + $0x50] sm:$0xff]
        %v1121 = vld [vmem:[#allocation7 + $0x58] sm:$0xff]
        %v1122 = vld [vmem:[#allocation7 + $0x60] sm:$0xff]
        %v1123 = vld [vmem:[#allocation7 + $0x68] sm:$0xff]
        %v1124 = vld [vmem:[#allocation7 + $0x70] sm:$0xff]
        %v1125 = vld [vmem:[#allocation7 + $0x78] sm:$0xff]
        %v1126 = vld [vmem:[%s7] sm:$0x1]
        %v1128 = vlaneseq
        %v1129 = vshrl.u32 %v1128, 7
        %v1130 = vsub.s32 0, %v1129
        %v1131 = vrot.slane %v1126, %v1130
        %1133 = vmatprep.subr.mxu0 0.0
        %1134 = vmatpush1.msra.mxu0 %v1110
        %1135 = vmatprep.subr.mxu0 0.0
        %1136 = vmatpush1.msra.mxu0 %v1111
        %1137 = vmatprep.subr.mxu0 0.0
        %1138 = vmatpush1.msra.mxu0 %v1112
        %1139 = vmatprep.subr.mxu0 0.0
        %1140 = vmatpush1.msra.mxu0 %v1113
        %1141 = vmatprep.subr.mxu0 0.0
        %1142 = vmatpush1.msra.mxu0 %v1114
        %1143 = vmatprep.subr.mxu0 0.0
        %1144 = vmatpush1.msra.mxu0 %v1115
        %1145 = vmatprep.subr.mxu0 0.0
        %1146 = vmatpush1.msra.mxu0 %v1116
        %1147 = vmatprep.subr.mxu0 0.0
        %1148 = vmatpush1.msra.mxu0 %v1117
        %1149 = vmatprep.subr.mxu0 0.0
        %1150 = vmatpush1.msra.mxu0 %v1118
        %1151 = vmatprep.subr.mxu0 0.0
        %1152 = vmatpush1.msra.mxu0 %v1119
        %1153 = vmatprep.subr.mxu0 0.0
        %1154 = vmatpush1.msra.mxu0 %v1120
        %1155 = vmatprep.subr.mxu0 0.0
        %1156 = vmatpush1.msra.mxu0 %v1121
        %1157 = vmatprep.subr.mxu0 0.0
        %1158 = vmatpush1.msra.mxu0 %v1122
        %1159 = vmatprep.subr.mxu0 0.0
        %1160 = vmatpush1.msra.mxu0 %v1123
        %1161 = vmatprep.subr.mxu0 0.0
        %1162 = vmatpush1.msra.mxu0 %v1124
        %1163 = vmatprep.subr.mxu0 0.0
        %1164 = vmatpush1.msra.mxu0 %v1125
        %1165 = vmatprep.subr.mxu0 0.0
        %1166 = vmatpush1.msra.mxu0 0.0
        %1167 = vmatprep.subr.mxu0 0.0
        %1168 = vmatpush1.msra.mxu0 0.0
        %1169 = vmatprep.subr.mxu0 0.0
        %1170 = vmatpush1.msra.mxu0 0.0
        %1171 = vmatprep.subr.mxu0 0.0
        %1172 = vmatpush1.msra.mxu0 0.0
        %1173 = vmatprep.subr.mxu0 0.0
        %1174 = vmatpush1.msra.mxu0 0.0
        %1175 = vmatprep.subr.mxu0 0.0
        %1176 = vmatpush1.msra.mxu0 0.0
        %1177 = vmatprep.subr.mxu0 0.0
        %1178 = vmatpush1.msra.mxu0 0.0
        %1179 = vmatprep.subr.mxu0 0.0
        %1180 = vmatpush1.msra.mxu0 0.0
        %1181 = vmatprep.subr.mxu0 0.0
        %1182 = vmatpush1.msra.mxu0 0.0
        %1183 = vmatprep.subr.mxu0 0.0
        %1184 = vmatpush1.msra.mxu0 0.0
        %1185 = vmatprep.subr.mxu0 0.0
        %1186 = vmatpush1.msra.mxu0 0.0
        %1187 = vmatprep.subr.mxu0 0.0
        %1188 = vmatpush1.msra.mxu0 0.0
        %1189 = vmatprep.subr.mxu0 0.0
        %1190 = vmatpush1.msra.mxu0 0.0
        %1191 = vmatprep.subr.mxu0 0.0
        %1192 = vmatpush1.msra.mxu0 0.0
        %1193 = vmatprep.subr.mxu0 0.0
        %1194 = vmatpush1.msra.mxu0 0.0
        %1195 = vmatprep.subr.mxu0 0.0
        %1196 = vmatpush1.msra.mxu0 0.0
        %1197 = vmatprep.mubr.f32.mxu0 0.0
        %1198 = vmatmul.mubr.f32.gmra.mrb[0].mxu0 %v1107
        %v1199 = vpop.f32.mrb[0].mxu0
        %v1200 = vadd.f32 %v1131, %v1199
        %v1201 = vpop.f32.mrb[0].mxu0
        %1202 = vdwg.mxu0
        %v1203 = vld [vmem:[%s8] sm:$0x1]
        %v1204 = vld [vmem:[%s9] sm:$0x1]
        %vm1205 = vcmp.lt.s32.totalorder %v916, 32
        %v1206 = vsel %vm1205, 1, 0
        %v1207 = vcvt.s32.f32 %v1206
        %1208 = vadd.xlane.f32.xlu0 %v1200
        %v1209 = vpop.xlane.xlu0 %1208
        %v1210 = vmul.f32 %v1209, 0.03125
        %v1211 = vsub.f32 %v1200, %v1210
        %v1212 = vmul.f32 %v1211, %v1207
        %v1213 = vmul.f32 %v1212, %v1212
        %1214 = vadd.xlane.f32.xlu0 %v1213
        %v1215 = vpop.xlane.xlu0 %1214
        %v1216 = vmul.f32 %v1215, 0.03125
        %v1217 = vadd.f32 %v1216, 1e-05
        %v1218 = vrsqrt.pop %v1217
        %v1219 = vmul.f32 %v1212, %v1218
        %v1221 = vlaneseq
        %v1222 = vshrl.u32 %v1221, 7
        %v1223 = vsub.s32 0, %v1222
        %v1224 = vrot.slane %v1203, %v1223
        %v1226 = vmul.f32 %v1219, %v1224
        %v1228 = vlaneseq
        %v1229 = vshrl.u32 %v1228, 7
        %v1230 = vsub.s32 0, %v1229
        %v1231 = vrot.slane %v1204, %v1230
        %v1233 = vadd.f32 %v1226, %v1231
        %1234 = vadd.xlane.f32.xlu0 %v575
        %v1235 = vpop.xlane.xlu0 %1234
        %v1236 = vmul.f32 %v1235, 0.03125
        %v1237 = vsub.f32 %v575, %v1236
        %v1238 = vmul.f32 %v1237, %v1207
        %v1239 = vmul.f32 %v1238, %v1238
        %1240 = vadd.xlane.f32.xlu0 %v1239
        %v1241 = vpop.xlane.xlu0 %1240
        %v1242 = vmul.f32 %v1241, 0.03125
        %v1243 = vadd.f32 %v1242, 1e-05
        %v1244 = vrsqrt.pop %v1243
        %v1245 = vmul.f32 %v1238, %v1244
        %v1246 = vmul.f32 %v1245, %v1224
        %v1247 = vadd.f32 %v1246, %v1231
        %v1248 = vadd.f32 %v1233, %v1247
        %v1249 = vmul.f32 %v1248, 0.5
        %v1250 = vmul.f32 %v1248, 0.70710677
        %v1251 = verf.f32.pop %v1250
        %v1252 = vadd.f32 %v1251, 1.0
        %v1253 = vmul.f32 %v1249, %v1252
        %1254 = vst [vmem:[%s441] sm:$0xff] %v1253
        %s1255 = sand.u32 %s272, 1
        %s1256 = scalar_lea.sflag [#allocation4], %s1255
        %s1257 = sand.u32 %s272, 1
        %s1258 = smul.addr %s1257, 8
        %s1259 = scalar_lea.vmem [#allocation8], %s1258
        // Predicated region
        $region73: #{potential_forward.1} parent=59 // pred_check
          %p1260 = pneg %p282
        $region74: #{potential_forward.1} parent=59 // pred_check_branch
          %1262 = sbr.rel (%p1260) target = $region76
        $region75: #{potential_forward.1} parent=59 // pred_region
          %s1264 = ssub.s32 128, 128
          %1265 = vsyncadd %s1256, %s1264
          %s1266 = sadd.s32 %s31, %s30
          %s1267 = smul.addr %s1266, 128
          %s1268 = scalar_lea.hbm %s10, %s1267
          %s1270 = sshll.u32 %s1259, 4
          %s1271 = int_to_ptr.vmem [resolvable:$true] %s1270
          %1273 = dma.vmem_to_hbm [thread:$0]  %s1271, 128, %s1268, %s1256
        $region76: #{potential_forward.1} parent=59 // pred_fallthru
          _
      $region60: #{potential_forward.1} parent=5 // pred_fallthru
        _
      %p1274 = scmp.le.s32.totalorder 2, %s21
      // Predicated region
      $region77: #{potential_forward.1} parent=5 // pred_check
        %p1275 = pneg %p1274
      $region78: #{potential_forward.1} parent=5 // pred_check_branch
        %1277 = sbr.rel (%p1275) target = $region80
      $region79: #{potential_forward.1} parent=5 // pred_region
        %s1278 = ssub.s32 %s21, 2
        // Predicated region
        $region81: #{potential_forward.1} parent=79 // pred_check
          %p1279 = pneg %p288
        $region82: #{potential_forward.1} parent=79 // pred_check_branch
          %1281 = sbr.rel (%p1279) target = $region84
        $region83: #{potential_forward.1} parent=79 // pred_region
          %s1282 = sand.u32 %s273, 1
          %s1283 = scalar_lea.sflag [#allocation4], %s1282
          %s1284 = sand.u32 %s273, 1
          %s1285 = smul.addr %s1284, 8
          %s1286 = scalar_lea.vmem [#allocation8], %s1285
          %1287 = dma.done %s1283, 128
        $region84: #{potential_forward.1} parent=79 // pred_fallthru
          _
      $region80: #{potential_forward.1} parent=5 // pred_fallthru
        _
    $region6: #{potential_forward.1} parent=1 // loop_footer
      %s25 = sadd.s32 1, %s21
    $region7: #{potential_forward.1} parent=1 // loop_footer_branch
      %20 = sbr.rel target = $region3
    $region8: #{potential_forward.1} parent=1 // loop_exit
      _
    %1288 = vsyncpa [#allocation3], 1
    %s1289 = scalar_lea.sflag [#allocation3], 1
    %1290 = vsyncpa %s1289, 1
    %1291 = vsyncpa [#allocation6], 1
    %1292 = vsyncpa [#allocation4], 1
    %s1293 = scalar_lea.sflag [#allocation4], 1
    %1294 = vsyncpa %s1293, 1

</llo_original>
